<compile_context>
chip_gen: v5e
topology: v5e:2x2
jax: 0.10.0
libtpu: 0.0.40
codegen_flags: <defaults>
</compile_context>

<pallas_src>
import functools

import jax
import jax.numpy as jnp
import numpy as np
from jax import lax
from jax.experimental import pallas as pl
from jax.experimental.pallas import tpu as pltpu

_BP = 8      # sublane-padded batch
_GP = 128    # lane-padded width of each gate block


def _lstm_fc_kernel(x_ref, w_ih_ref, w_hh_ref, fc_ref, out_ref, *, T):
    """x_ref: (T*8, I+1) bf16 (time-major, batch padded, constant-1 bias col)
       w_ih_ref: (I+1, 4*128) bf16, gate order [i|f|o|g], bias in last row
       w_hh_ref: (128, 4*128) bf16, rows >= H zeroed
       fc_ref:   (2, 128) f32 -- row 0 = fc weight (lane-padded), row 1 lane 0 = fc bias
       out_ref:  (8, 1) f32"""
    # ---- Hoisted input projection (bias folded in), off the serial path ------
    x_proj = jnp.dot(x_ref[...], w_ih_ref[...],
                     preferred_element_type=jnp.float32)          # (T*8, 512) f32

    w_hh = w_hh_ref[...]                                          # (128, 512) bf16

    h = jnp.zeros((_BP, _GP), jnp.float32)
    c = jnp.zeros((_BP, _GP), jnp.float32)

    # T is small and static: fully unroll so h/c stay in vregs.
    # Every slice below is (8-sublane, 128-lane)-aligned.
    for t in range(T):
        pre = x_proj[t * _BP:(t + 1) * _BP, :] + jnp.dot(
            h.astype(jnp.bfloat16), w_hh, preferred_element_type=jnp.float32)
        # Gate order [i|f|o|g]: one sigmoid over the contiguous sigmoid block.
        sig = jax.nn.sigmoid(pre[:, :3 * _GP])
        i_g = sig[:, 0 * _GP:1 * _GP]
        f_g = sig[:, 1 * _GP:2 * _GP]
        o_g = sig[:, 2 * _GP:3 * _GP]
        g_g = jnp.tanh(pre[:, 3 * _GP:4 * _GP])
        c = f_g * c + i_g * g_g
        h = o_g * jnp.tanh(c)
        # Padded lanes: W columns/rows there are zero -> g_g = tanh(0) = 0,
        # so c and h stay exactly 0 in dead lanes.

    # ---- Final Linear on last hidden state: VPU mul + cross-lane reduce ------
    fc = fc_ref[...]                                              # (2, 128)
    w_fc = fc[0:1, :]                                             # (1, 128)
    b_fc = fc[1:2, 0:1]                                           # (1, 1)
    out_ref[...] = jnp.sum(h * w_fc, axis=-1, keepdims=True) + b_fc


def lstm_fc_forward(x, w_ih_pt, w_hh_pt, b_ih_pt, b_hh_pt, w_fc_pt, b_fc_pt):
    """PyTorch-layout params:
       w_ih_pt (4H, I), w_hh_pt (4H, H), b_ih_pt/b_hh_pt (4H,) with gate blocks
       stacked (i, f, g, o); w_fc_pt (1, H); b_fc_pt (1,).  x: (B, T, I)."""
    B, T, I = x.shape
    H = w_hh_pt.shape[1]
    assert B <= _BP and H <= _GP

    # --- Repack gates: reorder to (i, f, o, g), transpose, lane-pad to 128. ---
    def pack_gates(w_pt):                       # (4H, D) -> (D, 4*128)
        i_, f_, g_, o_ = jnp.split(w_pt, 4, axis=0)
        blocks = []
        for blk in (i_, f_, o_, g_):            # sigmoid gates contiguous
            blocks.append(jnp.pad(blk.T, ((0, 0), (0, _GP - H))))
        return jnp.concatenate(blocks, axis=1)

    w_ih_g = pack_gates(w_ih_pt)                                  # (I, 512)
    w_hh_g = pack_gates(w_hh_pt)                                  # (H, 512)
    b_g = pack_gates((b_ih_pt + b_hh_pt).reshape(4 * H, 1))       # (1, 512)

    # Fold bias into W_ih via a constant-1 feature column: (I+1, 512) bf16.
    w_ih_aug = jnp.concatenate([w_ih_g, b_g], axis=0).astype(jnp.bfloat16)
    # Zero-pad W_hh rows to the padded hidden width (128): (128, 512) bf16.
    w_hh_pad = jnp.pad(w_hh_g, ((0, _GP - H), (0, 0))).astype(jnp.bfloat16)

    # fc weight + bias packed into one small operand: (2, 128) f32.
    fc_w = jnp.pad(w_fc_pt.astype(jnp.float32), ((0, 0), (0, _GP - H)))
    fc_b = jnp.zeros((1, _GP), jnp.float32).at[0, 0].set(b_fc_pt[0])
    fc_packed = jnp.concatenate([fc_w, fc_b], axis=0)

    # Time-major, batch padded to 8 sublanes, constant-1 bias column, bf16.
    x_tm = jnp.transpose(x, (1, 0, 2))                            # (T, B, I)
    x_tm = jnp.pad(x_tm, ((0, 0), (0, _BP - B), (0, 0)))          # (T, 8, I)
    ones = jnp.ones((T, _BP, 1), x.dtype)
    x_aug = jnp.concatenate([x_tm, ones], axis=-1)                # (T, 8, I+1)
    x_aug = x_aug.reshape(T * _BP, I + 1).astype(jnp.bfloat16)

    kernel = functools.partial(_lstm_fc_kernel, T=T)

    out_pad = pl.pallas_call(
        kernel,
        out_shape=jax.ShapeDtypeStruct((_BP, 1), jnp.float32),
        in_specs=[pl.BlockSpec(memory_space=pltpu.MemorySpace.VMEM)
                  for _ in range(4)],
        out_specs=pl.BlockSpec(memory_space=pltpu.MemorySpace.VMEM),
    )(x_aug, w_ih_aug, w_hh_pad, fc_packed)
    return out_pad[:B]


def reference_forward(x, w_ih_pt, w_hh_pt, b_ih_pt, b_hh_pt, w_fc_pt, b_fc_pt):
    """Pure-JAX f32 reference with PyTorch LSTM semantics (gate order i,f,g,o)."""
    B, T, I = x.shape
    H = w_hh_pt.shape[1]
    w_ih = w_ih_pt.T                                              # (I, 4H)
    w_hh = w_hh_pt.T                                              # (H, 4H)
    b = (b_ih_pt + b_hh_pt).reshape(1, 4 * H)

    def step(carry, x_t):
        h, c = carry
        pre = x_t @ w_ih + h @ w_hh + b
        i = jax.nn.sigmoid(pre[:, 0 * H:1 * H])
        f = jax.nn.sigmoid(pre[:, 1 * H:2 * H])
        g = jnp.tanh(pre[:, 2 * H:3 * H])
        o = jax.nn.sigmoid(pre[:, 3 * H:4 * H])
        c = f * c + i * g
        h = o * jnp.tanh(c)
        return (h, c), None

    h0 = jnp.zeros((B, H), jnp.float32)
    c0 = jnp.zeros((B, H), jnp.float32)
    (hT, _), _ = lax.scan(step, (h0, c0), jnp.swapaxes(x, 0, 1))
    return hT @ w_fc_pt.T + b_fc_pt.reshape(1, 1)


if __name__ == "__main__":
    B, T, I, H = 2, 8, 4, 50

    key = jax.random.PRNGKey(0)
    k_x, k_wih, k_whh, k_bih, k_bhh, k_wfc, k_bfc = jax.random.split(key, 7)

    scale = 1.0 / np.sqrt(H)   # PyTorch init range uniform(-1/sqrt(H), 1/sqrt(H))

    x = jax.random.normal(k_x, (B, T, I), jnp.float32)

    # PyTorch layouts: weight_ih (4H, I), weight_hh (4H, H), biases (4H,),
    # fc weight (1, H), fc bias (1,). Gate blocks stacked as (i, f, g, o).
    w_ih_pt = jax.random.uniform(k_wih, (4 * H, I), jnp.float32, -scale, scale)
    w_hh_pt = jax.random.uniform(k_whh, (4 * H, H), jnp.float32, -scale, scale)
    b_ih_pt = jax.random.uniform(k_bih, (4 * H,), jnp.float32, -scale, scale)
    b_hh_pt = jax.random.uniform(k_bhh, (4 * H,), jnp.float32, -scale, scale)
    w_fc_pt = jax.random.uniform(k_wfc, (1, H), jnp.float32, -scale, scale)
    b_fc_pt = jax.random.uniform(k_bfc, (1,), jnp.float32, -scale, scale)

    out = lstm_fc_forward(x, w_ih_pt, w_hh_pt, b_ih_pt, b_hh_pt, w_fc_pt, b_fc_pt)
    out = jax.block_until_ready(out)

    ref = reference_forward(x, w_ih_pt, w_hh_pt, b_ih_pt, b_hh_pt,
                            w_fc_pt, b_fc_pt)
    # Tolerance accounts for bf16 MXU operands (input projection + recurrence);
    # accumulation and all gate math are f32.
    np.testing.assert_allclose(np.asarray(out), np.asarray(ref),
                               rtol=1e-2, atol=1e-2)

    print("KERNEL_OK")
</pallas_src>

<mosaic_0001>
module attributes {stable_mosaic.version = 11 : i64} {
  func.func @_lstm_fc_kernel(%arg0: memref<64x5xbf16, #tpu.memory_space<vmem>>, %arg1: memref<5x512xbf16, #tpu.memory_space<vmem>>, %arg2: memref<128x512xbf16, #tpu.memory_space<vmem>>, %arg3: memref<2x128xf32, #tpu.memory_space<vmem>>, %arg4: memref<8x1xf32, #tpu.memory_space<vmem>>) attributes {dimension_semantics = [], scalar_prefetch = 0 : i64, scratch_operands = 0 : i64, tpu.core_type = #tpu.core_type<tc>} {
    %c0 = arith.constant 0 : index
    %c0_0 = arith.constant 0 : index
    %0 = vector.load %arg0[%c0, %c0_0] : memref<64x5xbf16, #tpu.memory_space<vmem>>, vector<64x5xbf16>
    %c0_1 = arith.constant 0 : index
    %c0_2 = arith.constant 0 : index
    %1 = vector.load %arg1[%c0_1, %c0_2] : memref<5x512xbf16, #tpu.memory_space<vmem>>, vector<5x512xbf16>
    %cst = arith.constant dense<0.000000e+00> : vector<64x512xf32>
    %2 = tpu.matmul %0, %1, %cst {dimension_numbers = #tpu.dot_dimension_numbers<[1], [0], [0], [1], [0, 0, 1, 1], [], []>} : vector<64x5xbf16>, vector<5x512xbf16>, vector<64x512xf32> -> vector<64x512xf32>
    %c0_3 = arith.constant 0 : index
    %c0_4 = arith.constant 0 : index
    %3 = vector.load %arg2[%c0_3, %c0_4] : memref<128x512xbf16, #tpu.memory_space<vmem>>, vector<128x512xbf16>
    %cst_5 = arith.constant 0.000000e+00 : f32
    %4 = vector.broadcast %cst_5 : f32 to vector<8x128xf32>
    %cst_6 = arith.constant 0.000000e+00 : f32
    %5 = vector.broadcast %cst_6 : f32 to vector<8x128xf32>
    %6 = vector.extract_strided_slice %2 {offsets = [0, 0], sizes = [8, 512], strides = [1, 1]} : vector<64x512xf32> to vector<8x512xf32>
    %7 = arith.truncf %4 : vector<8x128xf32> to vector<8x128xbf16>
    %cst_7 = arith.constant dense<0.000000e+00> : vector<8x512xf32>
    %8 = tpu.matmul %7, %3, %cst_7 {dimension_numbers = #tpu.dot_dimension_numbers<[1], [0], [0], [1], [0, 0, 1, 1], [], []>} : vector<8x128xbf16>, vector<128x512xbf16>, vector<8x512xf32> -> vector<8x512xf32>
    %9 = arith.addf %6, %8 : vector<8x512xf32>
    %10 = vector.extract_strided_slice %9 {offsets = [0, 0], sizes = [8, 384], strides = [1, 1]} : vector<8x512xf32> to vector<8x384xf32>
    %11 = arith.negf %10 : vector<8x384xf32>
    %12 = math.exp %11 : vector<8x384xf32>
    %cst_8 = arith.constant 1.000000e+00 : f32
    %13 = vector.broadcast %cst_8 : f32 to vector<8x384xf32>
    %14 = arith.addf %13, %12 : vector<8x384xf32>
    %15 = arith.divf %13, %14 : vector<8x384xf32>
    %16 = vector.extract_strided_slice %15 {offsets = [0, 0], sizes = [8, 128], strides = [1, 1]} : vector<8x384xf32> to vector<8x128xf32>
    %17 = vector.extract_strided_slice %15 {offsets = [0, 128], sizes = [8, 128], strides = [1, 1]} : vector<8x384xf32> to vector<8x128xf32>
    %18 = vector.extract_strided_slice %15 {offsets = [0, 256], sizes = [8, 128], strides = [1, 1]} : vector<8x384xf32> to vector<8x128xf32>
    %19 = vector.extract_strided_slice %9 {offsets = [0, 384], sizes = [8, 128], strides = [1, 1]} : vector<8x512xf32> to vector<8x128xf32>
    %20 = math.tanh %19 : vector<8x128xf32>
    %21 = arith.mulf %17, %5 : vector<8x128xf32>
    %22 = arith.mulf %16, %20 : vector<8x128xf32>
    %23 = arith.addf %21, %22 : vector<8x128xf32>
    %24 = math.tanh %23 : vector<8x128xf32>
    %25 = arith.mulf %18, %24 : vector<8x128xf32>
    %26 = vector.extract_strided_slice %2 {offsets = [8, 0], sizes = [8, 512], strides = [1, 1]} : vector<64x512xf32> to vector<8x512xf32>
    %27 = arith.truncf %25 : vector<8x128xf32> to vector<8x128xbf16>
    %cst_9 = arith.constant dense<0.000000e+00> : vector<8x512xf32>
    %28 = tpu.matmul %27, %3, %cst_9 {dimension_numbers = #tpu.dot_dimension_numbers<[1], [0], [0], [1], [0, 0, 1, 1], [], []>} : vector<8x128xbf16>, vector<128x512xbf16>, vector<8x512xf32> -> vector<8x512xf32>
    %29 = arith.addf %26, %28 : vector<8x512xf32>
    %30 = vector.extract_strided_slice %29 {offsets = [0, 0], sizes = [8, 384], strides = [1, 1]} : vector<8x512xf32> to vector<8x384xf32>
    %31 = arith.negf %30 : vector<8x384xf32>
    %32 = math.exp %31 : vector<8x384xf32>
    %cst_10 = arith.constant 1.000000e+00 : f32
    %33 = vector.broadcast %cst_10 : f32 to vector<8x384xf32>
    %34 = arith.addf %33, %32 : vector<8x384xf32>
    %35 = arith.divf %33, %34 : vector<8x384xf32>
    %36 = vector.extract_strided_slice %35 {offsets = [0, 0], sizes = [8, 128], strides = [1, 1]} : vector<8x384xf32> to vector<8x128xf32>
    %37 = vector.extract_strided_slice %35 {offsets = [0, 128], sizes = [8, 128], strides = [1, 1]} : vector<8x384xf32> to vector<8x128xf32>
    %38 = vector.extract_strided_slice %35 {offsets = [0, 256], sizes = [8, 128], strides = [1, 1]} : vector<8x384xf32> to vector<8x128xf32>
    %39 = vector.extract_strided_slice %29 {offsets = [0, 384], sizes = [8, 128], strides = [1, 1]} : vector<8x512xf32> to vector<8x128xf32>
    %40 = math.tanh %39 : vector<8x128xf32>
    %41 = arith.mulf %37, %23 : vector<8x128xf32>
    %42 = arith.mulf %36, %40 : vector<8x128xf32>
    %43 = arith.addf %41, %42 : vector<8x128xf32>
    %44 = math.tanh %43 : vector<8x128xf32>
    %45 = arith.mulf %38, %44 : vector<8x128xf32>
    %46 = vector.extract_strided_slice %2 {offsets = [16, 0], sizes = [8, 512], strides = [1, 1]} : vector<64x512xf32> to vector<8x512xf32>
    %47 = arith.truncf %45 : vector<8x128xf32> to vector<8x128xbf16>
    %cst_11 = arith.constant dense<0.000000e+00> : vector<8x512xf32>
    %48 = tpu.matmul %47, %3, %cst_11 {dimension_numbers = #tpu.dot_dimension_numbers<[1], [0], [0], [1], [0, 0, 1, 1], [], []>} : vector<8x128xbf16>, vector<128x512xbf16>, vector<8x512xf32> -> vector<8x512xf32>
    %49 = arith.addf %46, %48 : vector<8x512xf32>
    %50 = vector.extract_strided_slice %49 {offsets = [0, 0], sizes = [8, 384], strides = [1, 1]} : vector<8x512xf32> to vector<8x384xf32>
    %51 = arith.negf %50 : vector<8x384xf32>
    %52 = math.exp %51 : vector<8x384xf32>
    %cst_12 = arith.constant 1.000000e+00 : f32
    %53 = vector.broadcast %cst_12 : f32 to vector<8x384xf32>
    %54 = arith.addf %53, %52 : vector<8x384xf32>
    %55 = arith.divf %53, %54 : vector<8x384xf32>
    %56 = vector.extract_strided_slice %55 {offsets = [0, 0], sizes = [8, 128], strides = [1, 1]} : vector<8x384xf32> to vector<8x128xf32>
    %57 = vector.extract_strided_slice %55 {offsets = [0, 128], sizes = [8, 128], strides = [1, 1]} : vector<8x384xf32> to vector<8x128xf32>
    %58 = vector.extract_strided_slice %55 {offsets = [0, 256], sizes = [8, 128], strides = [1, 1]} : vector<8x384xf32> to vector<8x128xf32>
    %59 = vector.extract_strided_slice %49 {offsets = [0, 384], sizes = [8, 128], strides = [1, 1]} : vector<8x512xf32> to vector<8x128xf32>
    %60 = math.tanh %59 : vector<8x128xf32>
    %61 = arith.mulf %57, %43 : vector<8x128xf32>
    %62 = arith.mulf %56, %60 : vector<8x128xf32>
    %63 = arith.addf %61, %62 : vector<8x128xf32>
    %64 = math.tanh %63 : vector<8x128xf32>
    %65 = arith.mulf %58, %64 : vector<8x128xf32>
    %66 = vector.extract_strided_slice %2 {offsets = [24, 0], sizes = [8, 512], strides = [1, 1]} : vector<64x512xf32> to vector<8x512xf32>
    %67 = arith.truncf %65 : vector<8x128xf32> to vector<8x128xbf16>
    %cst_13 = arith.constant dense<0.000000e+00> : vector<8x512xf32>
    %68 = tpu.matmul %67, %3, %cst_13 {dimension_numbers = #tpu.dot_dimension_numbers<[1], [0], [0], [1], [0, 0, 1, 1], [], []>} : vector<8x128xbf16>, vector<128x512xbf16>, vector<8x512xf32> -> vector<8x512xf32>
    %69 = arith.addf %66, %68 : vector<8x512xf32>
    %70 = vector.extract_strided_slice %69 {offsets = [0, 0], sizes = [8, 384], strides = [1, 1]} : vector<8x512xf32> to vector<8x384xf32>
    %71 = arith.negf %70 : vector<8x384xf32>
    %72 = math.exp %71 : vector<8x384xf32>
    %cst_14 = arith.constant 1.000000e+00 : f32
    %73 = vector.broadcast %cst_14 : f32 to vector<8x384xf32>
    %74 = arith.addf %73, %72 : vector<8x384xf32>
    %75 = arith.divf %73, %74 : vector<8x384xf32>
    %76 = vector.extract_strided_slice %75 {offsets = [0, 0], sizes = [8, 128], strides = [1, 1]} : vector<8x384xf32> to vector<8x128xf32>
    %77 = vector.extract_strided_slice %75 {offsets = [0, 128], sizes = [8, 128], strides = [1, 1]} : vector<8x384xf32> to vector<8x128xf32>
    %78 = vector.extract_strided_slice %75 {offsets = [0, 256], sizes = [8, 128], strides = [1, 1]} : vector<8x384xf32> to vector<8x128xf32>
    %79 = vector.extract_strided_slice %69 {offsets = [0, 384], sizes = [8, 128], strides = [1, 1]} : vector<8x512xf32> to vector<8x128xf32>
    %80 = math.tanh %79 : vector<8x128xf32>
    %81 = arith.mulf %77, %63 : vector<8x128xf32>
    %82 = arith.mulf %76, %80 : vector<8x128xf32>
    %83 = arith.addf %81, %82 : vector<8x128xf32>
    %84 = math.tanh %83 : vector<8x128xf32>
    %85 = arith.mulf %78, %84 : vector<8x128xf32>
    %86 = vector.extract_strided_slice %2 {offsets = [32, 0], sizes = [8, 512], strides = [1, 1]} : vector<64x512xf32> to vector<8x512xf32>
    %87 = arith.truncf %85 : vector<8x128xf32> to vector<8x128xbf16>
    %cst_15 = arith.constant dense<0.000000e+00> : vector<8x512xf32>
    %88 = tpu.matmul %87, %3, %cst_15 {dimension_numbers = #tpu.dot_dimension_numbers<[1], [0], [0], [1], [0, 0, 1, 1], [], []>} : vector<8x128xbf16>, vector<128x512xbf16>, vector<8x512xf32> -> vector<8x512xf32>
    %89 = arith.addf %86, %88 : vector<8x512xf32>
    %90 = vector.extract_strided_slice %89 {offsets = [0, 0], sizes = [8, 384], strides = [1, 1]} : vector<8x512xf32> to vector<8x384xf32>
    %91 = arith.negf %90 : vector<8x384xf32>
    %92 = math.exp %91 : vector<8x384xf32>
    %cst_16 = arith.constant 1.000000e+00 : f32
    %93 = vector.broadcast %cst_16 : f32 to vector<8x384xf32>
    %94 = arith.addf %93, %92 : vector<8x384xf32>
    %95 = arith.divf %93, %94 : vector<8x384xf32>
    %96 = vector.extract_strided_slice %95 {offsets = [0, 0], sizes = [8, 128], strides = [1, 1]} : vector<8x384xf32> to vector<8x128xf32>
    %97 = vector.extract_strided_slice %95 {offsets = [0, 128], sizes = [8, 128], strides = [1, 1]} : vector<8x384xf32> to vector<8x128xf32>
    %98 = vector.extract_strided_slice %95 {offsets = [0, 256], sizes = [8, 128], strides = [1, 1]} : vector<8x384xf32> to vector<8x128xf32>
    %99 = vector.extract_strided_slice %89 {offsets = [0, 384], sizes = [8, 128], strides = [1, 1]} : vector<8x512xf32> to vector<8x128xf32>
    %100 = math.tanh %99 : vector<8x128xf32>
    %101 = arith.mulf %97, %83 : vector<8x128xf32>
    %102 = arith.mulf %96, %100 : vector<8x128xf32>
    %103 = arith.addf %101, %102 : vector<8x128xf32>
    %104 = math.tanh %103 : vector<8x128xf32>
    %105 = arith.mulf %98, %104 : vector<8x128xf32>
    %106 = vector.extract_strided_slice %2 {offsets = [40, 0], sizes = [8, 512], strides = [1, 1]} : vector<64x512xf32> to vector<8x512xf32>
    %107 = arith.truncf %105 : vector<8x128xf32> to vector<8x128xbf16>
    %cst_17 = arith.constant dense<0.000000e+00> : vector<8x512xf32>
    %108 = tpu.matmul %107, %3, %cst_17 {dimension_numbers = #tpu.dot_dimension_numbers<[1], [0], [0], [1], [0, 0, 1, 1], [], []>} : vector<8x128xbf16>, vector<128x512xbf16>, vector<8x512xf32> -> vector<8x512xf32>
    %109 = arith.addf %106, %108 : vector<8x512xf32>
    %110 = vector.extract_strided_slice %109 {offsets = [0, 0], sizes = [8, 384], strides = [1, 1]} : vector<8x512xf32> to vector<8x384xf32>
    %111 = arith.negf %110 : vector<8x384xf32>
    %112 = math.exp %111 : vector<8x384xf32>
    %cst_18 = arith.constant 1.000000e+00 : f32
    %113 = vector.broadcast %cst_18 : f32 to vector<8x384xf32>
    %114 = arith.addf %113, %112 : vector<8x384xf32>
    %115 = arith.divf %113, %114 : vector<8x384xf32>
    %116 = vector.extract_strided_slice %115 {offsets = [0, 0], sizes = [8, 128], strides = [1, 1]} : vector<8x384xf32> to vector<8x128xf32>
    %117 = vector.extract_strided_slice %115 {offsets = [0, 128], sizes = [8, 128], strides = [1, 1]} : vector<8x384xf32> to vector<8x128xf32>
    %118 = vector.extract_strided_slice %115 {offsets = [0, 256], sizes = [8, 128], strides = [1, 1]} : vector<8x384xf32> to vector<8x128xf32>
    %119 = vector.extract_strided_slice %109 {offsets = [0, 384], sizes = [8, 128], strides = [1, 1]} : vector<8x512xf32> to vector<8x128xf32>
    %120 = math.tanh %119 : vector<8x128xf32>
    %121 = arith.mulf %117, %103 : vector<8x128xf32>
    %122 = arith.mulf %116, %120 : vector<8x128xf32>
    %123 = arith.addf %121, %122 : vector<8x128xf32>
    %124 = math.tanh %123 : vector<8x128xf32>
    %125 = arith.mulf %118, %124 : vector<8x128xf32>
    %126 = vector.extract_strided_slice %2 {offsets = [48, 0], sizes = [8, 512], strides = [1, 1]} : vector<64x512xf32> to vector<8x512xf32>
    %127 = arith.truncf %125 : vector<8x128xf32> to vector<8x128xbf16>
    %cst_19 = arith.constant dense<0.000000e+00> : vector<8x512xf32>
    %128 = tpu.matmul %127, %3, %cst_19 {dimension_numbers = #tpu.dot_dimension_numbers<[1], [0], [0], [1], [0, 0, 1, 1], [], []>} : vector<8x128xbf16>, vector<128x512xbf16>, vector<8x512xf32> -> vector<8x512xf32>
    %129 = arith.addf %126, %128 : vector<8x512xf32>
    %130 = vector.extract_strided_slice %129 {offsets = [0, 0], sizes = [8, 384], strides = [1, 1]} : vector<8x512xf32> to vector<8x384xf32>
    %131 = arith.negf %130 : vector<8x384xf32>
    %132 = math.exp %131 : vector<8x384xf32>
    %cst_20 = arith.constant 1.000000e+00 : f32
    %133 = vector.broadcast %cst_20 : f32 to vector<8x384xf32>
    %134 = arith.addf %133, %132 : vector<8x384xf32>
    %135 = arith.divf %133, %134 : vector<8x384xf32>
    %136 = vector.extract_strided_slice %135 {offsets = [0, 0], sizes = [8, 128], strides = [1, 1]} : vector<8x384xf32> to vector<8x128xf32>
    %137 = vector.extract_strided_slice %135 {offsets = [0, 128], sizes = [8, 128], strides = [1, 1]} : vector<8x384xf32> to vector<8x128xf32>
    %138 = vector.extract_strided_slice %135 {offsets = [0, 256], sizes = [8, 128], strides = [1, 1]} : vector<8x384xf32> to vector<8x128xf32>
    %139 = vector.extract_strided_slice %129 {offsets = [0, 384], sizes = [8, 128], strides = [1, 1]} : vector<8x512xf32> to vector<8x128xf32>
    %140 = math.tanh %139 : vector<8x128xf32>
    %141 = arith.mulf %137, %123 : vector<8x128xf32>
    %142 = arith.mulf %136, %140 : vector<8x128xf32>
    %143 = arith.addf %141, %142 : vector<8x128xf32>
    %144 = math.tanh %143 : vector<8x128xf32>
    %145 = arith.mulf %138, %144 : vector<8x128xf32>
    %146 = vector.extract_strided_slice %2 {offsets = [56, 0], sizes = [8, 512], strides = [1, 1]} : vector<64x512xf32> to vector<8x512xf32>
    %147 = arith.truncf %145 : vector<8x128xf32> to vector<8x128xbf16>
    %cst_21 = arith.constant dense<0.000000e+00> : vector<8x512xf32>
    %148 = tpu.matmul %147, %3, %cst_21 {dimension_numbers = #tpu.dot_dimension_numbers<[1], [0], [0], [1], [0, 0, 1, 1], [], []>} : vector<8x128xbf16>, vector<128x512xbf16>, vector<8x512xf32> -> vector<8x512xf32>
    %149 = arith.addf %146, %148 : vector<8x512xf32>
    %150 = vector.extract_strided_slice %149 {offsets = [0, 0], sizes = [8, 384], strides = [1, 1]} : vector<8x512xf32> to vector<8x384xf32>
    %151 = arith.negf %150 : vector<8x384xf32>
    %152 = math.exp %151 : vector<8x384xf32>
    %cst_22 = arith.constant 1.000000e+00 : f32
    %153 = vector.broadcast %cst_22 : f32 to vector<8x384xf32>
    %154 = arith.addf %153, %152 : vector<8x384xf32>
    %155 = arith.divf %153, %154 : vector<8x384xf32>
    %156 = vector.extract_strided_slice %155 {offsets = [0, 0], sizes = [8, 128], strides = [1, 1]} : vector<8x384xf32> to vector<8x128xf32>
    %157 = vector.extract_strided_slice %155 {offsets = [0, 128], sizes = [8, 128], strides = [1, 1]} : vector<8x384xf32> to vector<8x128xf32>
    %158 = vector.extract_strided_slice %155 {offsets = [0, 256], sizes = [8, 128], strides = [1, 1]} : vector<8x384xf32> to vector<8x128xf32>
    %159 = vector.extract_strided_slice %149 {offsets = [0, 384], sizes = [8, 128], strides = [1, 1]} : vector<8x512xf32> to vector<8x128xf32>
    %160 = math.tanh %159 : vector<8x128xf32>
    %161 = arith.mulf %157, %143 : vector<8x128xf32>
    %162 = arith.mulf %156, %160 : vector<8x128xf32>
    %163 = arith.addf %161, %162 : vector<8x128xf32>
    %164 = math.tanh %163 : vector<8x128xf32>
    %165 = arith.mulf %158, %164 : vector<8x128xf32>
    %c0_23 = arith.constant 0 : index
    %c0_24 = arith.constant 0 : index
    %166 = vector.load %arg3[%c0_23, %c0_24] : memref<2x128xf32, #tpu.memory_space<vmem>>, vector<2x128xf32>
    %167 = vector.extract_strided_slice %166 {offsets = [0, 0], sizes = [1, 128], strides = [1, 1]} : vector<2x128xf32> to vector<1x128xf32>
    %168 = vector.extract_strided_slice %166 {offsets = [1, 0], sizes = [1, 1], strides = [1, 1]} : vector<2x128xf32> to vector<1x1xf32>
    %169 = vector.broadcast %167 : vector<1x128xf32> to vector<8x128xf32>
    %170 = arith.mulf %165, %169 : vector<8x128xf32>
    %cst_25 = arith.constant dense<0.000000e+00> : vector<8xf32>
    %171 = vector.multi_reduction <add>, %170, %cst_25 [1] : vector<8x128xf32> to vector<8xf32>
    %172 = vector.shape_cast %171 : vector<8xf32> to vector<8x1xf32>
    %173 = vector.broadcast %168 : vector<1x1xf32> to vector<8x1xf32>
    %174 = arith.addf %172, %173 : vector<8x1xf32>
    %c0_26 = arith.constant 0 : index
    %c0_27 = arith.constant 0 : index
    %175 = vector.load %arg4[%c0_26, %c0_27] : memref<8x1xf32, #tpu.memory_space<vmem>>, vector<8x1xf32>
    tpu.vector_store %arg4[%c0_26, %c0_27], %174 {strides = array<i32>} : memref<8x1xf32, #tpu.memory_space<vmem>>, vector<8x1xf32>,
    return
  }
}

</mosaic_0001>

<llo_original>
// kernel: tpu_custom_call.1
$region0: #{tpu_custom_call.1}
  #allocation0 [shape = 'u32[]', space=smem, size = 0x4, offset = 0x4, fixed_abs, tag = 'smem constant byte address 0x4 - core index']
  #allocation1 [shape = 'u32[72,128]{1,0:T(1,128)}', space=vmem, size = 0x9000, scoped, tag = 'internal scratch']
  %s0 = inlined_call_operand.vmem [shape: bf16[64,5], index: 0, kind: input, shape index: {}]
  %s1 = inlined_call_operand.vmem [shape: bf16[5,512], index: 1, kind: input, shape index: {}]
  %s2 = inlined_call_operand.hbm [shape: bf16[128,512], index: 2, kind: input, shape index: {}]
  %s3 = inlined_call_operand.vmem [shape: f32[2,128], index: 3, kind: input, shape index: {}]
  %s4 = inlined_call_operand.vmem [shape: f32[8,1], index: 4, kind: output, shape index: {}]
  %s5 = sld [smem:[#allocation0]]
  $region30: #{tpu_custom_call.1} parent=0
    _
  %s7 = ssub.s32 1, %s5
  %s8 = scalar_select 0, %s7, %s5
  $region1: #{tpu_custom_call.1} parent=0
    #allocation2 [shape = 'u8[131072]{0}', space=vmem, size = 0x20000, scoped, tag = 'input window, operand 2, single buffered']
    #allocation3 [shape = 's32[1]{0}', space=sflag, size = 0x4, scoped, tag = 'scoped memory for tpu_custom_call.1']
    %9 = vsyncpa [#allocation3], 0
    // Predicated region
    $region2: #{tpu_custom_call.1} parent=1 // pred_check
      _
    $region3: #{tpu_custom_call.1} parent=1 // pred_check_branch
      %11 = sbr.rel (0) target = $region5
    $region4: #{tpu_custom_call.1} parent=1 // pred_region
      _
    $region5: #{tpu_custom_call.1} parent=1 // pred_fallthru
      _
    // Predicated region
    $region6: #{tpu_custom_call.1} parent=1 // pred_check
      _
    $region7: #{tpu_custom_call.1} parent=1 // pred_check_branch
      %13 = sbr.rel (0) target = $region9
    $region8: #{tpu_custom_call.1} parent=1 // pred_region
      _
    $region9: #{tpu_custom_call.1} parent=1 // pred_fallthru
      _
    // Predicated region
    $region10: #{tpu_custom_call.1} parent=1 // pred_check
      _
    $region11: #{tpu_custom_call.1} parent=1 // pred_check_branch
      %15 = sbr.rel (0) target = $region13
    $region12: #{tpu_custom_call.1} parent=1 // pred_region
      %17 = vsyncadd [#allocation3], 0
      %s18 = sshll.u32 %s2, 4
      %s19 = int_to_ptr.hbm [resolvable:$true] %s18
      %s20 = sshll.u32 [#allocation2], 4
      %s21 = int_to_ptr.vmem [resolvable:$true] %s20
      %26 = dma.hbm_to_vmem [thread:$0]  %s19, 4096, %s21, [#allocation3], 256, 256, 16
    $region13: #{tpu_custom_call.1} parent=1 // pred_fallthru
      _
    // Predicated region
    $region14: #{tpu_custom_call.1} parent=1 // pred_check
      _
    $region15: #{tpu_custom_call.1} parent=1 // pred_check_branch
      %28 = sbr.rel (0) target = $region17
    $region16: #{tpu_custom_call.1} parent=1 // pred_region
      _
    $region17: #{tpu_custom_call.1} parent=1 // pred_fallthru
      _
    // Predicated region
    $region18: #{tpu_custom_call.1} parent=1 // pred_check
      _
    $region19: #{tpu_custom_call.1} parent=1 // pred_check_branch
      %30 = sbr.rel (0) target = $region21
    $region20: #{tpu_custom_call.1} parent=1 // pred_region
      %32 = dma.done [#allocation3], 4096
    $region21: #{tpu_custom_call.1} parent=1 // pred_fallthru
      _
    %v34 = vld [vmem:[%s0] sm:$0xf]
    %v35 = vld [vmem:[%s0 + $0x4] sm:$0xf]
    %v36 = vld [vmem:[%s0 + $0x8] sm:$0xf]
    %v37 = vld [vmem:[%s0 + $0xc] sm:$0xf]
    %v38 = vld [vmem:[%s0 + $0x10] sm:$0xf]
    %v39 = vld [vmem:[%s0 + $0x14] sm:$0xf]
    %v40 = vld [vmem:[%s0 + $0x18] sm:$0xf]
    %v41 = vld [vmem:[%s0 + $0x1c] sm:$0xf]
    %v42 = vld [vmem:[%s1] sm:$0x77]
    %v43 = vld [vmem:[%s1 + $0x8] sm:$0x77]
    %v52 = vunpack.c.l.b16 %v34
    %v53 = vunpack.c.l.b16 %v35
    %v54 = vunpack.c.l.b16 %v36
    %v55 = vunpack.c.l.b16 %v37
    %v56 = vunpack.c.l.b16 %v38
    %v57 = vunpack.c.l.b16 %v39
    %v58 = vunpack.c.l.b16 %v40
    %v59 = vunpack.c.l.b16 %v41
    %v60 = vpack.c.b16 %v53, %v52
    %v61 = vpack.c.b16 %v55, %v54
    %v62 = vpack.c.b16 %v57, %v56
    %v63 = vpack.c.b16 %v59, %v58
    %v66 = vunpack.c.l.b16 %v42
    %v67 = vunpack.c.h.b16 %v42
    %v68 = vunpack.c.l.b16 %v43
    %v69 = vunpack.c.h.b16 %v43
    %v70 = vpack.c.b16 %v66, %v66
    %v71 = vpack.c.b16 %v67, %v67
    %v72 = vpack.c.b16 %v68, %v68
    %v73 = vpack.c.b16 %v69, %v69
    %vm74 = vcmask 39936
    %v76 = vsel %vm74, %v60, 0
    %v79 = vsel %vm74, %v61, 0
    %v82 = vsel %vm74, %v62, 0
    %v85 = vsel %vm74, %v63, 0
    %vm87 = vcmask 1041408
    %vm88 = vcmask 1042432
    %v89 = vsel %vm87, 4294967295, 65535
    %v90 = vsel %vm88, %v89, 0
    %v92 = vand.u32 %v70, %v90
    %v95 = vand.u32 %v71, %v90
    %v98 = vand.u32 %v72, %v90
    %v101 = vand.u32 %v73, %v90
    %103 = vmatpush.bf16.msra.mxu0 0
    %104 = vmatpush.bf16.msra.mxu0 0
    %105 = vmatpush.bf16.msra.mxu0 0
    %106 = vmatpush.bf16.msra.mxu0 0
    %107 = vmatpush.bf16.msra.mxu0 0
    %108 = vmatpush.bf16.msra.mxu0 0
    %109 = vmatpush.bf16.msra.mxu0 0
    %110 = vmatpush.bf16.msra.mxu0 %v92
    %111 = vmatmul.bf16.gmra.mxu0 %v76
    %v112 = vpop.f32.mrf.mxu0
    %v113 = vadd.f32 0.0, %v112
    %v114 = vpop.f32.mrf.mxu0
    %v115 = vadd.f32 0.0, %v114
    %116 = vmatmul.bf16.gmra.mxu0 %v79
    %v117 = vpop.f32.mrf.mxu0
    %v118 = vadd.f32 0.0, %v117
    %v119 = vpop.f32.mrf.mxu0
    %v120 = vadd.f32 0.0, %v119
    %121 = vmatmul.bf16.gmra.mxu0 %v82
    %v122 = vpop.f32.mrf.mxu0
    %v123 = vadd.f32 0.0, %v122
    %v124 = vpop.f32.mrf.mxu0
    %v125 = vadd.f32 0.0, %v124
    %126 = vmatmul.bf16.gmra.mxu0 %v85
    %v127 = vpop.f32.mrf.mxu0
    %v128 = vadd.f32 0.0, %v127
    %v129 = vpop.f32.mrf.mxu0
    %v130 = vadd.f32 0.0, %v129
    %131 = vdwg.mxu0
    %132 = vmatpush.bf16.msra.mxu0 0
    %133 = vmatpush.bf16.msra.mxu0 0
    %134 = vmatpush.bf16.msra.mxu0 0
    %135 = vmatpush.bf16.msra.mxu0 0
    %136 = vmatpush.bf16.msra.mxu0 0
    %137 = vmatpush.bf16.msra.mxu0 0
    %138 = vmatpush.bf16.msra.mxu0 0
    %139 = vmatpush.bf16.msra.mxu0 %v95
    %140 = vmatmul.bf16.gmra.mxu0 %v76
    %v141 = vpop.f32.mrf.mxu0
    %v142 = vadd.f32 0.0, %v141
    %v143 = vpop.f32.mrf.mxu0
    %v144 = vadd.f32 0.0, %v143
    %145 = vmatmul.bf16.gmra.mxu0 %v79
    %v146 = vpop.f32.mrf.mxu0
    %v147 = vadd.f32 0.0, %v146
    %v148 = vpop.f32.mrf.mxu0
    %v149 = vadd.f32 0.0, %v148
    %150 = vmatmul.bf16.gmra.mxu0 %v82
    %v151 = vpop.f32.mrf.mxu0
    %v152 = vadd.f32 0.0, %v151
    %v153 = vpop.f32.mrf.mxu0
    %v154 = vadd.f32 0.0, %v153
    %155 = vmatmul.bf16.gmra.mxu0 %v85
    %v156 = vpop.f32.mrf.mxu0
    %v157 = vadd.f32 0.0, %v156
    %v158 = vpop.f32.mrf.mxu0
    %v159 = vadd.f32 0.0, %v158
    %160 = vdwg.mxu0
    %161 = vmatpush.bf16.msra.mxu0 0
    %162 = vmatpush.bf16.msra.mxu0 0
    %163 = vmatpush.bf16.msra.mxu0 0
    %164 = vmatpush.bf16.msra.mxu0 0
    %165 = vmatpush.bf16.msra.mxu0 0
    %166 = vmatpush.bf16.msra.mxu0 0
    %167 = vmatpush.bf16.msra.mxu0 0
    %168 = vmatpush.bf16.msra.mxu0 %v98
    %169 = vmatmul.bf16.gmra.mxu0 %v76
    %v170 = vpop.f32.mrf.mxu0
    %v171 = vadd.f32 0.0, %v170
    %v172 = vpop.f32.mrf.mxu0
    %v173 = vadd.f32 0.0, %v172
    %174 = vmatmul.bf16.gmra.mxu0 %v79
    %v175 = vpop.f32.mrf.mxu0
    %v176 = vadd.f32 0.0, %v175
    %v177 = vpop.f32.mrf.mxu0
    %v178 = vadd.f32 0.0, %v177
    %179 = vmatmul.bf16.gmra.mxu0 %v82
    %v180 = vpop.f32.mrf.mxu0
    %v181 = vadd.f32 0.0, %v180
    %v182 = vpop.f32.mrf.mxu0
    %v183 = vadd.f32 0.0, %v182
    %184 = vmatmul.bf16.gmra.mxu0 %v85
    %v185 = vpop.f32.mrf.mxu0
    %v186 = vadd.f32 0.0, %v185
    %v187 = vpop.f32.mrf.mxu0
    %v188 = vadd.f32 0.0, %v187
    %189 = vdwg.mxu0
    %190 = vmatpush.bf16.msra.mxu0 0
    %191 = vmatpush.bf16.msra.mxu0 0
    %192 = vmatpush.bf16.msra.mxu0 0
    %193 = vmatpush.bf16.msra.mxu0 0
    %194 = vmatpush.bf16.msra.mxu0 0
    %195 = vmatpush.bf16.msra.mxu0 0
    %196 = vmatpush.bf16.msra.mxu0 0
    %197 = vmatpush.bf16.msra.mxu0 %v101
    %198 = vmatmul.bf16.gmra.mxu0 %v76
    %v199 = vpop.f32.mrf.mxu0
    %v200 = vadd.f32 0.0, %v199
    %v201 = vpop.f32.mrf.mxu0
    %v202 = vadd.f32 0.0, %v201
    %203 = vmatmul.bf16.gmra.mxu0 %v79
    %v204 = vpop.f32.mrf.mxu0
    %v205 = vadd.f32 0.0, %v204
    %v206 = vpop.f32.mrf.mxu0
    %v207 = vadd.f32 0.0, %v206
    %208 = vmatmul.bf16.gmra.mxu0 %v82
    %v209 = vpop.f32.mrf.mxu0
    %v210 = vadd.f32 0.0, %v209
    %v211 = vpop.f32.mrf.mxu0
    %v212 = vadd.f32 0.0, %v211
    %213 = vmatmul.bf16.gmra.mxu0 %v85
    %v214 = vpop.f32.mrf.mxu0
    %v215 = vadd.f32 0.0, %v214
    %v216 = vpop.f32.mrf.mxu0
    %v217 = vadd.f32 0.0, %v216
    %218 = vdwg.mxu0
    %v219 = vld [vmem:[#allocation2] sm:$0xff]
    %v220 = vld [vmem:[#allocation2 + $0x8] sm:$0xff]
    %v221 = vld [vmem:[#allocation2 + $0x10] sm:$0xff]
    %v222 = vld [vmem:[#allocation2 + $0x18] sm:$0xff]
    %v223 = vld [vmem:[#allocation2 + $0x20] sm:$0xff]
    %v224 = vld [vmem:[#allocation2 + $0x28] sm:$0xff]
    %v225 = vld [vmem:[#allocation2 + $0x30] sm:$0xff]
    %v226 = vld [vmem:[#allocation2 + $0x38] sm:$0xff]
    %v227 = vld [vmem:[#allocation2 + $0x40] sm:$0xff]
    %v228 = vld [vmem:[#allocation2 + $0x48] sm:$0xff]
    %v229 = vld [vmem:[#allocation2 + $0x50] sm:$0xff]
    %v230 = vld [vmem:[#allocation2 + $0x58] sm:$0xff]
    %v231 = vld [vmem:[#allocation2 + $0x60] sm:$0xff]
    %v232 = vld [vmem:[#allocation2 + $0x68] sm:$0xff]
    %v233 = vld [vmem:[#allocation2 + $0x70] sm:$0xff]
    %v234 = vld [vmem:[#allocation2 + $0x78] sm:$0xff]
    %v235 = vld [vmem:[#allocation2 + $0x80] sm:$0xff]
    %v236 = vld [vmem:[#allocation2 + $0x88] sm:$0xff]
    %v237 = vld [vmem:[#allocation2 + $0x90] sm:$0xff]
    %v238 = vld [vmem:[#allocation2 + $0x98] sm:$0xff]
    %v239 = vld [vmem:[#allocation2 + $0xa0] sm:$0xff]
    %v240 = vld [vmem:[#allocation2 + $0xa8] sm:$0xff]
    %v241 = vld [vmem:[#allocation2 + $0xb0] sm:$0xff]
    %v242 = vld [vmem:[#allocation2 + $0xb8] sm:$0xff]
    %v243 = vld [vmem:[#allocation2 + $0xc0] sm:$0xff]
    %v244 = vld [vmem:[#allocation2 + $0xc8] sm:$0xff]
    %v245 = vld [vmem:[#allocation2 + $0xd0] sm:$0xff]
    %v246 = vld [vmem:[#allocation2 + $0xd8] sm:$0xff]
    %v247 = vld [vmem:[#allocation2 + $0xe0] sm:$0xff]
    %v248 = vld [vmem:[#allocation2 + $0xe8] sm:$0xff]
    %v249 = vld [vmem:[#allocation2 + $0xf0] sm:$0xff]
    %v250 = vld [vmem:[#allocation2 + $0xf8] sm:$0xff]
    %v283 = vunpack.c.l.b16 %v219
    %v284 = vunpack.c.h.b16 %v219
    %v285 = vunpack.c.l.b16 %v220
    %v286 = vunpack.c.h.b16 %v220
    %v287 = vunpack.c.l.b16 %v221
    %v288 = vunpack.c.h.b16 %v221
    %v289 = vunpack.c.l.b16 %v222
    %v290 = vunpack.c.h.b16 %v222
    %v291 = vunpack.c.l.b16 %v223
    %v292 = vunpack.c.h.b16 %v223
    %v293 = vunpack.c.l.b16 %v224
    %v294 = vunpack.c.h.b16 %v224
    %v295 = vunpack.c.l.b16 %v225
    %v296 = vunpack.c.h.b16 %v225
    %v297 = vunpack.c.l.b16 %v226
    %v298 = vunpack.c.h.b16 %v226
    %v299 = vunpack.c.l.b16 %v227
    %v300 = vunpack.c.h.b16 %v227
    %v301 = vunpack.c.l.b16 %v228
    %v302 = vunpack.c.h.b16 %v228
    %v303 = vunpack.c.l.b16 %v229
    %v304 = vunpack.c.h.b16 %v229
    %v305 = vunpack.c.l.b16 %v230
    %v306 = vunpack.c.h.b16 %v230
    %v307 = vunpack.c.l.b16 %v231
    %v308 = vunpack.c.h.b16 %v231
    %v309 = vunpack.c.l.b16 %v232
    %v310 = vunpack.c.h.b16 %v232
    %v311 = vunpack.c.l.b16 %v233
    %v312 = vunpack.c.h.b16 %v233
    %v313 = vunpack.c.l.b16 %v234
    %v314 = vunpack.c.h.b16 %v234
    %v315 = vunpack.c.l.b16 %v235
    %v316 = vunpack.c.h.b16 %v235
    %v317 = vunpack.c.l.b16 %v236
    %v318 = vunpack.c.h.b16 %v236
    %v319 = vunpack.c.l.b16 %v237
    %v320 = vunpack.c.h.b16 %v237
    %v321 = vunpack.c.l.b16 %v238
    %v322 = vunpack.c.h.b16 %v238
    %v323 = vunpack.c.l.b16 %v239
    %v324 = vunpack.c.h.b16 %v239
    %v325 = vunpack.c.l.b16 %v240
    %v326 = vunpack.c.h.b16 %v240
    %v327 = vunpack.c.l.b16 %v241
    %v328 = vunpack.c.h.b16 %v241
    %v329 = vunpack.c.l.b16 %v242
    %v330 = vunpack.c.h.b16 %v242
    %v331 = vunpack.c.l.b16 %v243
    %v332 = vunpack.c.h.b16 %v243
    %v333 = vunpack.c.l.b16 %v244
    %v334 = vunpack.c.h.b16 %v244
    %v335 = vunpack.c.l.b16 %v245
    %v336 = vunpack.c.h.b16 %v245
    %v337 = vunpack.c.l.b16 %v246
    %v338 = vunpack.c.h.b16 %v246
    %v339 = vunpack.c.l.b16 %v247
    %v340 = vunpack.c.h.b16 %v247
    %v341 = vunpack.c.l.b16 %v248
    %v342 = vunpack.c.h.b16 %v248
    %v343 = vunpack.c.l.b16 %v249
    %v344 = vunpack.c.h.b16 %v249
    %v345 = vunpack.c.l.b16 %v250
    %v346 = vunpack.c.h.b16 %v250
    %v347 = vpack.c.b16 %v287, %v283
    %v348 = vpack.c.b16 %v288, %v284
    %v349 = vpack.c.b16 %v289, %v285
    %v350 = vpack.c.b16 %v290, %v286
    %v351 = vpack.c.b16 %v295, %v291
    %v352 = vpack.c.b16 %v296, %v292
    %v353 = vpack.c.b16 %v297, %v293
    %v354 = vpack.c.b16 %v298, %v294
    %v355 = vpack.c.b16 %v303, %v299
    %v356 = vpack.c.b16 %v304, %v300
    %v357 = vpack.c.b16 %v305, %v301
    %v358 = vpack.c.b16 %v306, %v302
    %v359 = vpack.c.b16 %v311, %v307
    %v360 = vpack.c.b16 %v312, %v308
    %v361 = vpack.c.b16 %v313, %v309
    %v362 = vpack.c.b16 %v314, %v310
    %v363 = vpack.c.b16 %v319, %v315
    %v364 = vpack.c.b16 %v320, %v316
    %v365 = vpack.c.b16 %v321, %v317
    %v366 = vpack.c.b16 %v322, %v318
    %v367 = vpack.c.b16 %v327, %v323
    %v368 = vpack.c.b16 %v328, %v324
    %v369 = vpack.c.b16 %v329, %v325
    %v370 = vpack.c.b16 %v330, %v326
    %v371 = vpack.c.b16 %v335, %v331
    %v372 = vpack.c.b16 %v336, %v332
    %v373 = vpack.c.b16 %v337, %v333
    %v374 = vpack.c.b16 %v338, %v334
    %v375 = vpack.c.b16 %v343, %v339
    %v376 = vpack.c.b16 %v344, %v340
    %v377 = vpack.c.b16 %v345, %v341
    %v378 = vpack.c.b16 %v346, %v342
    %411 = vmatpush.bf16.msra.mxu0 %v375
    %412 = vmatpush.bf16.msra.mxu0 %v371
    %413 = vmatpush.bf16.msra.mxu0 %v367
    %414 = vmatpush.bf16.msra.mxu0 %v363
    %415 = vmatpush.bf16.msra.mxu0 %v359
    %416 = vmatpush.bf16.msra.mxu0 %v355
    %417 = vmatpush.bf16.msra.mxu0 %v351
    %418 = vmatpush.bf16.msra.mxu0 %v347
    %419 = vmatmul.bf16.gmra.mxu0 0
    %v420 = vpop.f32.mrf.mxu0
    %v421 = vadd.f32 0.0, %v420
    %v422 = vpop.f32.mrf.mxu0
    %423 = vdwg.mxu0
    %424 = vmatpush.bf16.msra.mxu0 %v376
    %425 = vmatpush.bf16.msra.mxu0 %v372
    %426 = vmatpush.bf16.msra.mxu0 %v368
    %427 = vmatpush.bf16.msra.mxu0 %v364
    %428 = vmatpush.bf16.msra.mxu0 %v360
    %429 = vmatpush.bf16.msra.mxu0 %v356
    %430 = vmatpush.bf16.msra.mxu0 %v352
    %431 = vmatpush.bf16.msra.mxu0 %v348
    %432 = vmatmul.bf16.gmra.mxu0 0
    %v433 = vpop.f32.mrf.mxu0
    %v434 = vadd.f32 0.0, %v433
    %v435 = vpop.f32.mrf.mxu0
    %436 = vdwg.mxu0
    %437 = vmatpush.bf16.msra.mxu0 %v377
    %438 = vmatpush.bf16.msra.mxu0 %v373
    %439 = vmatpush.bf16.msra.mxu0 %v369
    %440 = vmatpush.bf16.msra.mxu0 %v365
    %441 = vmatpush.bf16.msra.mxu0 %v361
    %442 = vmatpush.bf16.msra.mxu0 %v357
    %443 = vmatpush.bf16.msra.mxu0 %v353
    %444 = vmatpush.bf16.msra.mxu0 %v349
    %445 = vmatmul.bf16.gmra.mxu0 0
    %v446 = vpop.f32.mrf.mxu0
    %v447 = vadd.f32 0.0, %v446
    %v448 = vpop.f32.mrf.mxu0
    %449 = vdwg.mxu0
    %450 = vmatpush.bf16.msra.mxu0 %v378
    %451 = vmatpush.bf16.msra.mxu0 %v374
    %452 = vmatpush.bf16.msra.mxu0 %v370
    %453 = vmatpush.bf16.msra.mxu0 %v366
    %454 = vmatpush.bf16.msra.mxu0 %v362
    %455 = vmatpush.bf16.msra.mxu0 %v358
    %456 = vmatpush.bf16.msra.mxu0 %v354
    %457 = vmatpush.bf16.msra.mxu0 %v350
    %458 = vmatmul.bf16.gmra.mxu0 0
    %v459 = vpop.f32.mrf.mxu0
    %v460 = vadd.f32 0.0, %v459
    %v461 = vpop.f32.mrf.mxu0
    %462 = vdwg.mxu0
    %v463 = vadd.f32 %v113, %v421
    %v464 = vadd.f32 %v142, %v434
    %v465 = vadd.f32 %v171, %v447
    %v466 = vadd.f32 %v200, %v460
    %v467 = vxor.u32 %v463, 2147483648
    %v468 = vxor.u32 %v464, 2147483648
    %v469 = vxor.u32 %v465, 2147483648
    %v470 = vmul.f32 %v467, 1.442695
    %v471 = vpow.pop %v470
    %v472 = vmul.f32 %v468, 1.442695
    %v473 = vpow.pop %v472
    %v474 = vmul.f32 %v469, 1.442695
    %v475 = vpow.pop %v474
    %v476 = vadd.f32 %v471, 1.0
    %v477 = vadd.f32 %v473, 1.0
    %v478 = vadd.f32 %v475, 1.0
    %v479 = vrcp.pop %v476
    %v480 = vmul.f32 %v476, %v479
    %v481 = vsub.f32 1.0, %v480
    %v482 = vmul.f32 %v479, %v481
    %v483 = vadd.f32 %v479, %v482
    %vm484 = vweird.f32 %v476
    %vm485 = vweird.f32 %v479
    %vm486 = vmor %vm484, %vm485
    %v487 = vsel %vm486, %v479, %v483
    %v488 = vand.u32 2147483647, %v476
    %vm489 = vcmp.eq.f32.partialorder %v488, 8.507059e+37
    %v490 = vand.u32 %v476, 2147483648
    %v491 = vor.u32 1.1754944e-38, %v490
    %v492 = vsel %vm489, %v491, %v487
    %v493 = vmul.f32 1.0, %v492
    %v494 = vrcp.pop %v477
    %v495 = vmul.f32 %v477, %v494
    %v496 = vsub.f32 1.0, %v495
    %v497 = vmul.f32 %v494, %v496
    %v498 = vadd.f32 %v494, %v497
    %vm499 = vweird.f32 %v477
    %vm500 = vweird.f32 %v494
    %vm501 = vmor %vm499, %vm500
    %v502 = vsel %vm501, %v494, %v498
    %v503 = vand.u32 2147483647, %v477
    %vm504 = vcmp.eq.f32.partialorder %v503, 8.507059e+37
    %v505 = vand.u32 %v477, 2147483648
    %v506 = vor.u32 1.1754944e-38, %v505
    %v507 = vsel %vm504, %v506, %v502
    %v508 = vmul.f32 1.0, %v507
    %v509 = vrcp.pop %v478
    %v510 = vmul.f32 %v478, %v509
    %v511 = vsub.f32 1.0, %v510
    %v512 = vmul.f32 %v509, %v511
    %v513 = vadd.f32 %v509, %v512
    %vm514 = vweird.f32 %v478
    %vm515 = vweird.f32 %v509
    %vm516 = vmor %vm514, %vm515
    %v517 = vsel %vm516, %v509, %v513
    %v518 = vand.u32 2147483647, %v478
    %vm519 = vcmp.eq.f32.partialorder %v518, 8.507059e+37
    %v520 = vand.u32 %v478, 2147483648
    %v521 = vor.u32 1.1754944e-38, %v520
    %v522 = vsel %vm519, %v521, %v517
    %v523 = vmul.f32 1.0, %v522
    %v524 = vtanh.pop %v466
    %v525 = vmul.f32 %v508, 0.0
    %v526 = vmul.f32 %v493, %v524
    %v527 = vadd.f32 %v525, %v526
    %v528 = vtanh.pop %v527
    %v529 = vmul.f32 %v523, %v528
    %v530 = vpack.c.bf16 %v529, %v529
    %531 = vmatpush.bf16.msra.mxu0 %v375
    %532 = vmatpush.bf16.msra.mxu0 %v371
    %533 = vmatpush.bf16.msra.mxu0 %v367
    %534 = vmatpush.bf16.msra.mxu0 %v363
    %535 = vmatpush.bf16.msra.mxu0 %v359
    %536 = vmatpush.bf16.msra.mxu0 %v355
    %537 = vmatpush.bf16.msra.mxu0 %v351
    %538 = vmatpush.bf16.msra.mxu0 %v347
    %539 = vmatmul.bf16.gmra.mxu0 %v530
    %v540 = vpop.f32.mrf.mxu0
    %v541 = vadd.f32 0.0, %v540
    %v542 = vpop.f32.mrf.mxu0
    %543 = vdwg.mxu0
    %544 = vmatpush.bf16.msra.mxu0 %v376
    %545 = vmatpush.bf16.msra.mxu0 %v372
    %546 = vmatpush.bf16.msra.mxu0 %v368
    %547 = vmatpush.bf16.msra.mxu0 %v364
    %548 = vmatpush.bf16.msra.mxu0 %v360
    %549 = vmatpush.bf16.msra.mxu0 %v356
    %550 = vmatpush.bf16.msra.mxu0 %v352
    %551 = vmatpush.bf16.msra.mxu0 %v348
    %552 = vmatmul.bf16.gmra.mxu0 %v530
    %v553 = vpop.f32.mrf.mxu0
    %v554 = vadd.f32 0.0, %v553
    %v555 = vpop.f32.mrf.mxu0
    %556 = vdwg.mxu0
    %557 = vmatpush.bf16.msra.mxu0 %v377
    %558 = vmatpush.bf16.msra.mxu0 %v373
    %559 = vmatpush.bf16.msra.mxu0 %v369
    %560 = vmatpush.bf16.msra.mxu0 %v365
    %561 = vmatpush.bf16.msra.mxu0 %v361
    %562 = vmatpush.bf16.msra.mxu0 %v357
    %563 = vmatpush.bf16.msra.mxu0 %v353
    %564 = vmatpush.bf16.msra.mxu0 %v349
    %565 = vmatmul.bf16.gmra.mxu0 %v530
    %v566 = vpop.f32.mrf.mxu0
    %v567 = vadd.f32 0.0, %v566
    %v568 = vpop.f32.mrf.mxu0
    %569 = vdwg.mxu0
    %570 = vmatpush.bf16.msra.mxu0 %v378
    %571 = vmatpush.bf16.msra.mxu0 %v374
    %572 = vmatpush.bf16.msra.mxu0 %v370
    %573 = vmatpush.bf16.msra.mxu0 %v366
    %574 = vmatpush.bf16.msra.mxu0 %v362
    %575 = vmatpush.bf16.msra.mxu0 %v358
    %576 = vmatpush.bf16.msra.mxu0 %v354
    %577 = vmatpush.bf16.msra.mxu0 %v350
    %578 = vmatmul.bf16.gmra.mxu0 %v530
    %v579 = vpop.f32.mrf.mxu0
    %v580 = vadd.f32 0.0, %v579
    %v581 = vpop.f32.mrf.mxu0
    %582 = vdwg.mxu0
    %v583 = vadd.f32 %v115, %v541
    %v584 = vadd.f32 %v144, %v554
    %v585 = vadd.f32 %v173, %v567
    %v586 = vadd.f32 %v202, %v580
    %v587 = vxor.u32 %v583, 2147483648
    %v588 = vxor.u32 %v584, 2147483648
    %v589 = vxor.u32 %v585, 2147483648
    %v590 = vmul.f32 %v587, 1.442695
    %v591 = vpow.pop %v590
    %v592 = vmul.f32 %v588, 1.442695
    %v593 = vpow.pop %v592
    %v594 = vmul.f32 %v589, 1.442695
    %v595 = vpow.pop %v594
    %v596 = vadd.f32 %v591, 1.0
    %v597 = vadd.f32 %v593, 1.0
    %v598 = vadd.f32 %v595, 1.0
    %v599 = vrcp.pop %v596
    %v600 = vmul.f32 %v596, %v599
    %v601 = vsub.f32 1.0, %v600
    %v602 = vmul.f32 %v599, %v601
    %v603 = vadd.f32 %v599, %v602
    %vm604 = vweird.f32 %v596
    %vm605 = vweird.f32 %v599
    %vm606 = vmor %vm604, %vm605
    %v607 = vsel %vm606, %v599, %v603
    %v608 = vand.u32 2147483647, %v596
    %vm609 = vcmp.eq.f32.partialorder %v608, 8.507059e+37
    %v610 = vand.u32 %v596, 2147483648
    %v611 = vor.u32 1.1754944e-38, %v610
    %v612 = vsel %vm609, %v611, %v607
    %v613 = vmul.f32 1.0, %v612
    %v614 = vrcp.pop %v597
    %v615 = vmul.f32 %v597, %v614
    %v616 = vsub.f32 1.0, %v615
    %v617 = vmul.f32 %v614, %v616
    %v618 = vadd.f32 %v614, %v617
    %vm619 = vweird.f32 %v597
    %vm620 = vweird.f32 %v614
    %vm621 = vmor %vm619, %vm620
    %v622 = vsel %vm621, %v614, %v618
    %v623 = vand.u32 2147483647, %v597
    %vm624 = vcmp.eq.f32.partialorder %v623, 8.507059e+37
    %v625 = vand.u32 %v597, 2147483648
    %v626 = vor.u32 1.1754944e-38, %v625
    %v627 = vsel %vm624, %v626, %v622
    %v628 = vmul.f32 1.0, %v627
    %v629 = vrcp.pop %v598
    %v630 = vmul.f32 %v598, %v629
    %v631 = vsub.f32 1.0, %v630
    %v632 = vmul.f32 %v629, %v631
    %v633 = vadd.f32 %v629, %v632
    %vm634 = vweird.f32 %v598
    %vm635 = vweird.f32 %v629
    %vm636 = vmor %vm634, %vm635
    %v637 = vsel %vm636, %v629, %v633
    %v638 = vand.u32 2147483647, %v598
    %vm639 = vcmp.eq.f32.partialorder %v638, 8.507059e+37
    %v640 = vand.u32 %v598, 2147483648
    %v641 = vor.u32 1.1754944e-38, %v640
    %v642 = vsel %vm639, %v641, %v637
    %v643 = vmul.f32 1.0, %v642
    %v644 = vtanh.pop %v586
    %v645 = vmul.f32 %v628, %v527
    %v646 = vmul.f32 %v613, %v644
    %v647 = vadd.f32 %v645, %v646
    %v648 = vtanh.pop %v647
    %v649 = vmul.f32 %v643, %v648
    %v650 = vpack.c.bf16 %v649, %v649
    %651 = vmatpush.bf16.msra.mxu0 %v375
    %652 = vmatpush.bf16.msra.mxu0 %v371
    %653 = vmatpush.bf16.msra.mxu0 %v367
    %654 = vmatpush.bf16.msra.mxu0 %v363
    %655 = vmatpush.bf16.msra.mxu0 %v359
    %656 = vmatpush.bf16.msra.mxu0 %v355
    %657 = vmatpush.bf16.msra.mxu0 %v351
    %658 = vmatpush.bf16.msra.mxu0 %v347
    %659 = vmatmul.bf16.gmra.mxu0 %v650
    %v660 = vpop.f32.mrf.mxu0
    %v661 = vadd.f32 0.0, %v660
    %v662 = vpop.f32.mrf.mxu0
    %663 = vdwg.mxu0
    %664 = vmatpush.bf16.msra.mxu0 %v376
    %665 = vmatpush.bf16.msra.mxu0 %v372
    %666 = vmatpush.bf16.msra.mxu0 %v368
    %667 = vmatpush.bf16.msra.mxu0 %v364
    %668 = vmatpush.bf16.msra.mxu0 %v360
    %669 = vmatpush.bf16.msra.mxu0 %v356
    %670 = vmatpush.bf16.msra.mxu0 %v352
    %671 = vmatpush.bf16.msra.mxu0 %v348
    %672 = vmatmul.bf16.gmra.mxu0 %v650
    %v673 = vpop.f32.mrf.mxu0
    %v674 = vadd.f32 0.0, %v673
    %v675 = vpop.f32.mrf.mxu0
    %676 = vdwg.mxu0
    %677 = vmatpush.bf16.msra.mxu0 %v377
    %678 = vmatpush.bf16.msra.mxu0 %v373
    %679 = vmatpush.bf16.msra.mxu0 %v369
    %680 = vmatpush.bf16.msra.mxu0 %v365
    %681 = vmatpush.bf16.msra.mxu0 %v361
    %682 = vmatpush.bf16.msra.mxu0 %v357
    %683 = vmatpush.bf16.msra.mxu0 %v353
    %684 = vmatpush.bf16.msra.mxu0 %v349
    %685 = vmatmul.bf16.gmra.mxu0 %v650
    %v686 = vpop.f32.mrf.mxu0
    %v687 = vadd.f32 0.0, %v686
    %v688 = vpop.f32.mrf.mxu0
    %689 = vdwg.mxu0
    %690 = vmatpush.bf16.msra.mxu0 %v378
    %691 = vmatpush.bf16.msra.mxu0 %v374
    %692 = vmatpush.bf16.msra.mxu0 %v370
    %693 = vmatpush.bf16.msra.mxu0 %v366
    %694 = vmatpush.bf16.msra.mxu0 %v362
    %695 = vmatpush.bf16.msra.mxu0 %v358
    %696 = vmatpush.bf16.msra.mxu0 %v354
    %697 = vmatpush.bf16.msra.mxu0 %v350
    %698 = vmatmul.bf16.gmra.mxu0 %v650
    %v699 = vpop.f32.mrf.mxu0
    %v700 = vadd.f32 0.0, %v699
    %v701 = vpop.f32.mrf.mxu0
    %702 = vdwg.mxu0
    %v703 = vadd.f32 %v118, %v661
    %v704 = vadd.f32 %v147, %v674
    %v705 = vadd.f32 %v176, %v687
    %v706 = vadd.f32 %v205, %v700
    %v707 = vxor.u32 %v703, 2147483648
    %v708 = vxor.u32 %v704, 2147483648
    %v709 = vxor.u32 %v705, 2147483648
    %v710 = vmul.f32 %v707, 1.442695
    %v711 = vpow.pop %v710
    %v712 = vmul.f32 %v708, 1.442695
    %v713 = vpow.pop %v712
    %v714 = vmul.f32 %v709, 1.442695
    %v715 = vpow.pop %v714
    %v716 = vadd.f32 %v711, 1.0
    %v717 = vadd.f32 %v713, 1.0
    %v718 = vadd.f32 %v715, 1.0
    %v719 = vrcp.pop %v716
    %v720 = vmul.f32 %v716, %v719
    %v721 = vsub.f32 1.0, %v720
    %v722 = vmul.f32 %v719, %v721
    %v723 = vadd.f32 %v719, %v722
    %vm724 = vweird.f32 %v716
    %vm725 = vweird.f32 %v719
    %vm726 = vmor %vm724, %vm725
    %v727 = vsel %vm726, %v719, %v723
    %v728 = vand.u32 2147483647, %v716
    %vm729 = vcmp.eq.f32.partialorder %v728, 8.507059e+37
    %v730 = vand.u32 %v716, 2147483648
    %v731 = vor.u32 1.1754944e-38, %v730
    %v732 = vsel %vm729, %v731, %v727
    %v733 = vmul.f32 1.0, %v732
    %v734 = vrcp.pop %v717
    %v735 = vmul.f32 %v717, %v734
    %v736 = vsub.f32 1.0, %v735
    %v737 = vmul.f32 %v734, %v736
    %v738 = vadd.f32 %v734, %v737
    %vm739 = vweird.f32 %v717
    %vm740 = vweird.f32 %v734
    %vm741 = vmor %vm739, %vm740
    %v742 = vsel %vm741, %v734, %v738
    %v743 = vand.u32 2147483647, %v717
    %vm744 = vcmp.eq.f32.partialorder %v743, 8.507059e+37
    %v745 = vand.u32 %v717, 2147483648
    %v746 = vor.u32 1.1754944e-38, %v745
    %v747 = vsel %vm744, %v746, %v742
    %v748 = vmul.f32 1.0, %v747
    %v749 = vrcp.pop %v718
    %v750 = vmul.f32 %v718, %v749
    %v751 = vsub.f32 1.0, %v750
    %v752 = vmul.f32 %v749, %v751
    %v753 = vadd.f32 %v749, %v752
    %vm754 = vweird.f32 %v718
    %vm755 = vweird.f32 %v749
    %vm756 = vmor %vm754, %vm755
    %v757 = vsel %vm756, %v749, %v753
    %v758 = vand.u32 2147483647, %v718
    %vm759 = vcmp.eq.f32.partialorder %v758, 8.507059e+37
    %v760 = vand.u32 %v718, 2147483648
    %v761 = vor.u32 1.1754944e-38, %v760
    %v762 = vsel %vm759, %v761, %v757
    %v763 = vmul.f32 1.0, %v762
    %v764 = vtanh.pop %v706
    %v765 = vmul.f32 %v748, %v647
    %v766 = vmul.f32 %v733, %v764
    %v767 = vadd.f32 %v765, %v766
    %v768 = vtanh.pop %v767
    %v769 = vmul.f32 %v763, %v768
    %v770 = vpack.c.bf16 %v769, %v769
    %771 = vmatpush.bf16.msra.mxu0 %v375
    %772 = vmatpush.bf16.msra.mxu0 %v371
    %773 = vmatpush.bf16.msra.mxu0 %v367
    %774 = vmatpush.bf16.msra.mxu0 %v363
    %775 = vmatpush.bf16.msra.mxu0 %v359
    %776 = vmatpush.bf16.msra.mxu0 %v355
    %777 = vmatpush.bf16.msra.mxu0 %v351
    %778 = vmatpush.bf16.msra.mxu0 %v347
    %779 = vmatmul.bf16.gmra.mxu0 %v770
    %v780 = vpop.f32.mrf.mxu0
    %v781 = vadd.f32 0.0, %v780
    %v782 = vpop.f32.mrf.mxu0
    %783 = vdwg.mxu0
    %784 = vmatpush.bf16.msra.mxu0 %v376
    %785 = vmatpush.bf16.msra.mxu0 %v372
    %786 = vmatpush.bf16.msra.mxu0 %v368
    %787 = vmatpush.bf16.msra.mxu0 %v364
    %788 = vmatpush.bf16.msra.mxu0 %v360
    %789 = vmatpush.bf16.msra.mxu0 %v356
    %790 = vmatpush.bf16.msra.mxu0 %v352
    %791 = vmatpush.bf16.msra.mxu0 %v348
    %792 = vmatmul.bf16.gmra.mxu0 %v770
    %v793 = vpop.f32.mrf.mxu0
    %v794 = vadd.f32 0.0, %v793
    %v795 = vpop.f32.mrf.mxu0
    %796 = vdwg.mxu0
    %797 = vmatpush.bf16.msra.mxu0 %v377
    %798 = vmatpush.bf16.msra.mxu0 %v373
    %799 = vmatpush.bf16.msra.mxu0 %v369
    %800 = vmatpush.bf16.msra.mxu0 %v365
    %801 = vmatpush.bf16.msra.mxu0 %v361
    %802 = vmatpush.bf16.msra.mxu0 %v357
    %803 = vmatpush.bf16.msra.mxu0 %v353
    %804 = vmatpush.bf16.msra.mxu0 %v349
    %805 = vmatmul.bf16.gmra.mxu0 %v770
    %v806 = vpop.f32.mrf.mxu0
    %v807 = vadd.f32 0.0, %v806
    %v808 = vpop.f32.mrf.mxu0
    %809 = vdwg.mxu0
    %810 = vmatpush.bf16.msra.mxu0 %v378
    %811 = vmatpush.bf16.msra.mxu0 %v374
    %812 = vmatpush.bf16.msra.mxu0 %v370
    %813 = vmatpush.bf16.msra.mxu0 %v366
    %814 = vmatpush.bf16.msra.mxu0 %v362
    %815 = vmatpush.bf16.msra.mxu0 %v358
    %816 = vmatpush.bf16.msra.mxu0 %v354
    %817 = vmatpush.bf16.msra.mxu0 %v350
    %818 = vmatmul.bf16.gmra.mxu0 %v770
    %v819 = vpop.f32.mrf.mxu0
    %v820 = vadd.f32 0.0, %v819
    %v821 = vpop.f32.mrf.mxu0
    %822 = vdwg.mxu0
    %v823 = vadd.f32 %v120, %v781
    %v824 = vadd.f32 %v149, %v794
    %v825 = vadd.f32 %v178, %v807
    %v826 = vadd.f32 %v207, %v820
    %v827 = vxor.u32 %v823, 2147483648
    %v828 = vxor.u32 %v824, 2147483648
    %v829 = vxor.u32 %v825, 2147483648
    %v830 = vmul.f32 %v827, 1.442695
    %v831 = vpow.pop %v830
    %v832 = vmul.f32 %v828, 1.442695
    %v833 = vpow.pop %v832
    %v834 = vmul.f32 %v829, 1.442695
    %v835 = vpow.pop %v834
    %v836 = vadd.f32 %v831, 1.0
    %v837 = vadd.f32 %v833, 1.0
    %v838 = vadd.f32 %v835, 1.0
    %v839 = vrcp.pop %v836
    %v840 = vmul.f32 %v836, %v839
    %v841 = vsub.f32 1.0, %v840
    %v842 = vmul.f32 %v839, %v841
    %v843 = vadd.f32 %v839, %v842
    %vm844 = vweird.f32 %v836
    %vm845 = vweird.f32 %v839
    %vm846 = vmor %vm844, %vm845
    %v847 = vsel %vm846, %v839, %v843
    %v848 = vand.u32 2147483647, %v836
    %vm849 = vcmp.eq.f32.partialorder %v848, 8.507059e+37
    %v850 = vand.u32 %v836, 2147483648
    %v851 = vor.u32 1.1754944e-38, %v850
    %v852 = vsel %vm849, %v851, %v847
    %v853 = vmul.f32 1.0, %v852
    %v854 = vrcp.pop %v837
    %v855 = vmul.f32 %v837, %v854
    %v856 = vsub.f32 1.0, %v855
    %v857 = vmul.f32 %v854, %v856
    %v858 = vadd.f32 %v854, %v857
    %vm859 = vweird.f32 %v837
    %vm860 = vweird.f32 %v854
    %vm861 = vmor %vm859, %vm860
    %v862 = vsel %vm861, %v854, %v858
    %v863 = vand.u32 2147483647, %v837
    %vm864 = vcmp.eq.f32.partialorder %v863, 8.507059e+37
    %v865 = vand.u32 %v837, 2147483648
    %v866 = vor.u32 1.1754944e-38, %v865
    %v867 = vsel %vm864, %v866, %v862
    %v868 = vmul.f32 1.0, %v867
    %v869 = vrcp.pop %v838
    %v870 = vmul.f32 %v838, %v869
    %v871 = vsub.f32 1.0, %v870
    %v872 = vmul.f32 %v869, %v871
    %v873 = vadd.f32 %v869, %v872
    %vm874 = vweird.f32 %v838
    %vm875 = vweird.f32 %v869
    %vm876 = vmor %vm874, %vm875
    %v877 = vsel %vm876, %v869, %v873
    %v878 = vand.u32 2147483647, %v838
    %vm879 = vcmp.eq.f32.partialorder %v878, 8.507059e+37
    %v880 = vand.u32 %v838, 2147483648
    %v881 = vor.u32 1.1754944e-38, %v880
    %v882 = vsel %vm879, %v881, %v877
    %v883 = vmul.f32 1.0, %v882
    %v884 = vtanh.pop %v826
    %v885 = vmul.f32 %v868, %v767
    %v886 = vmul.f32 %v853, %v884
    %v887 = vadd.f32 %v885, %v886
    %v888 = vtanh.pop %v887
    %v889 = vmul.f32 %v883, %v888
    %v890 = vpack.c.bf16 %v889, %v889
    %891 = vmatpush.bf16.msra.mxu0 %v375
    %892 = vmatpush.bf16.msra.mxu0 %v371
    %893 = vmatpush.bf16.msra.mxu0 %v367
    %894 = vmatpush.bf16.msra.mxu0 %v363
    %895 = vmatpush.bf16.msra.mxu0 %v359
    %896 = vmatpush.bf16.msra.mxu0 %v355
    %897 = vmatpush.bf16.msra.mxu0 %v351
    %898 = vmatpush.bf16.msra.mxu0 %v347
    %899 = vmatmul.bf16.gmra.mxu0 %v890
    %v900 = vpop.f32.mrf.mxu0
    %v901 = vadd.f32 0.0, %v900
    %v902 = vpop.f32.mrf.mxu0
    %903 = vdwg.mxu0
    %904 = vmatpush.bf16.msra.mxu0 %v376
    %905 = vmatpush.bf16.msra.mxu0 %v372
    %906 = vmatpush.bf16.msra.mxu0 %v368
    %907 = vmatpush.bf16.msra.mxu0 %v364
    %908 = vmatpush.bf16.msra.mxu0 %v360
    %909 = vmatpush.bf16.msra.mxu0 %v356
    %910 = vmatpush.bf16.msra.mxu0 %v352
    %911 = vmatpush.bf16.msra.mxu0 %v348
    %912 = vmatmul.bf16.gmra.mxu0 %v890
    %v913 = vpop.f32.mrf.mxu0
    %v914 = vadd.f32 0.0, %v913
    %v915 = vpop.f32.mrf.mxu0
    %916 = vdwg.mxu0
    %917 = vmatpush.bf16.msra.mxu0 %v377
    %918 = vmatpush.bf16.msra.mxu0 %v373
    %919 = vmatpush.bf16.msra.mxu0 %v369
    %920 = vmatpush.bf16.msra.mxu0 %v365
    %921 = vmatpush.bf16.msra.mxu0 %v361
    %922 = vmatpush.bf16.msra.mxu0 %v357
    %923 = vmatpush.bf16.msra.mxu0 %v353
    %924 = vmatpush.bf16.msra.mxu0 %v349
    %925 = vmatmul.bf16.gmra.mxu0 %v890
    %v926 = vpop.f32.mrf.mxu0
    %v927 = vadd.f32 0.0, %v926
    %v928 = vpop.f32.mrf.mxu0
    %929 = vdwg.mxu0
    %930 = vmatpush.bf16.msra.mxu0 %v378
    %931 = vmatpush.bf16.msra.mxu0 %v374
    %932 = vmatpush.bf16.msra.mxu0 %v370
    %933 = vmatpush.bf16.msra.mxu0 %v366
    %934 = vmatpush.bf16.msra.mxu0 %v362
    %935 = vmatpush.bf16.msra.mxu0 %v358
    %936 = vmatpush.bf16.msra.mxu0 %v354
    %937 = vmatpush.bf16.msra.mxu0 %v350
    %938 = vmatmul.bf16.gmra.mxu0 %v890
    %v939 = vpop.f32.mrf.mxu0
    %v940 = vadd.f32 0.0, %v939
    %v941 = vpop.f32.mrf.mxu0
    %942 = vdwg.mxu0
    %v943 = vadd.f32 %v123, %v901
    %v944 = vadd.f32 %v152, %v914
    %v945 = vadd.f32 %v181, %v927
    %v946 = vadd.f32 %v210, %v940
    %v947 = vxor.u32 %v943, 2147483648
    %v948 = vxor.u32 %v944, 2147483648
    %v949 = vxor.u32 %v945, 2147483648
    %v950 = vmul.f32 %v947, 1.442695
    %v951 = vpow.pop %v950
    %v952 = vmul.f32 %v948, 1.442695
    %v953 = vpow.pop %v952
    %v954 = vmul.f32 %v949, 1.442695
    %v955 = vpow.pop %v954
    %v956 = vadd.f32 %v951, 1.0
    %v957 = vadd.f32 %v953, 1.0
    %v958 = vadd.f32 %v955, 1.0
    %v959 = vrcp.pop %v956
    %v960 = vmul.f32 %v956, %v959
    %v961 = vsub.f32 1.0, %v960
    %v962 = vmul.f32 %v959, %v961
    %v963 = vadd.f32 %v959, %v962
    %vm964 = vweird.f32 %v956
    %vm965 = vweird.f32 %v959
    %vm966 = vmor %vm964, %vm965
    %v967 = vsel %vm966, %v959, %v963
    %v968 = vand.u32 2147483647, %v956
    %vm969 = vcmp.eq.f32.partialorder %v968, 8.507059e+37
    %v970 = vand.u32 %v956, 2147483648
    %v971 = vor.u32 1.1754944e-38, %v970
    %v972 = vsel %vm969, %v971, %v967
    %v973 = vmul.f32 1.0, %v972
    %v974 = vrcp.pop %v957
    %v975 = vmul.f32 %v957, %v974
    %v976 = vsub.f32 1.0, %v975
    %v977 = vmul.f32 %v974, %v976
    %v978 = vadd.f32 %v974, %v977
    %vm979 = vweird.f32 %v957
    %vm980 = vweird.f32 %v974
    %vm981 = vmor %vm979, %vm980
    %v982 = vsel %vm981, %v974, %v978
    %v983 = vand.u32 2147483647, %v957
    %vm984 = vcmp.eq.f32.partialorder %v983, 8.507059e+37
    %v985 = vand.u32 %v957, 2147483648
    %v986 = vor.u32 1.1754944e-38, %v985
    %v987 = vsel %vm984, %v986, %v982
    %v988 = vmul.f32 1.0, %v987
    %v989 = vrcp.pop %v958
    %v990 = vmul.f32 %v958, %v989
    %v991 = vsub.f32 1.0, %v990
    %v992 = vmul.f32 %v989, %v991
    %v993 = vadd.f32 %v989, %v992
    %vm994 = vweird.f32 %v958
    %vm995 = vweird.f32 %v989
    %vm996 = vmor %vm994, %vm995
    %v997 = vsel %vm996, %v989, %v993
    %v998 = vand.u32 2147483647, %v958
    %vm999 = vcmp.eq.f32.partialorder %v998, 8.507059e+37
    %v1000 = vand.u32 %v958, 2147483648
    %v1001 = vor.u32 1.1754944e-38, %v1000
    %v1002 = vsel %vm999, %v1001, %v997
    %v1003 = vmul.f32 1.0, %v1002
    %v1004 = vtanh.pop %v946
    %v1005 = vmul.f32 %v988, %v887
    %v1006 = vmul.f32 %v973, %v1004
    %v1007 = vadd.f32 %v1005, %v1006
    %v1008 = vtanh.pop %v1007
    %v1009 = vmul.f32 %v1003, %v1008
    %v1010 = vpack.c.bf16 %v1009, %v1009
    %1011 = vmatpush.bf16.msra.mxu0 %v375
    %1012 = vmatpush.bf16.msra.mxu0 %v371
    %1013 = vmatpush.bf16.msra.mxu0 %v367
    %1014 = vmatpush.bf16.msra.mxu0 %v363
    %1015 = vmatpush.bf16.msra.mxu0 %v359
    %1016 = vmatpush.bf16.msra.mxu0 %v355
    %1017 = vmatpush.bf16.msra.mxu0 %v351
    %1018 = vmatpush.bf16.msra.mxu0 %v347
    %1019 = vmatmul.bf16.gmra.mxu0 %v1010
    %v1020 = vpop.f32.mrf.mxu0
    %v1021 = vadd.f32 0.0, %v1020
    %v1022 = vpop.f32.mrf.mxu0
    %1023 = vdwg.mxu0
    %1024 = vmatpush.bf16.msra.mxu0 %v376
    %1025 = vmatpush.bf16.msra.mxu0 %v372
    %1026 = vmatpush.bf16.msra.mxu0 %v368
    %1027 = vmatpush.bf16.msra.mxu0 %v364
    %1028 = vmatpush.bf16.msra.mxu0 %v360
    %1029 = vmatpush.bf16.msra.mxu0 %v356
    %1030 = vmatpush.bf16.msra.mxu0 %v352
    %1031 = vmatpush.bf16.msra.mxu0 %v348
    %1032 = vmatmul.bf16.gmra.mxu0 %v1010
    %v1033 = vpop.f32.mrf.mxu0
    %v1034 = vadd.f32 0.0, %v1033
    %v1035 = vpop.f32.mrf.mxu0
    %1036 = vdwg.mxu0
    %1037 = vmatpush.bf16.msra.mxu0 %v377
    %1038 = vmatpush.bf16.msra.mxu0 %v373
    %1039 = vmatpush.bf16.msra.mxu0 %v369
    %1040 = vmatpush.bf16.msra.mxu0 %v365
    %1041 = vmatpush.bf16.msra.mxu0 %v361
    %1042 = vmatpush.bf16.msra.mxu0 %v357
    %1043 = vmatpush.bf16.msra.mxu0 %v353
    %1044 = vmatpush.bf16.msra.mxu0 %v349
    %1045 = vmatmul.bf16.gmra.mxu0 %v1010
    %v1046 = vpop.f32.mrf.mxu0
    %v1047 = vadd.f32 0.0, %v1046
    %v1048 = vpop.f32.mrf.mxu0
    %1049 = vdwg.mxu0
    %1050 = vmatpush.bf16.msra.mxu0 %v378
    %1051 = vmatpush.bf16.msra.mxu0 %v374
    %1052 = vmatpush.bf16.msra.mxu0 %v370
    %1053 = vmatpush.bf16.msra.mxu0 %v366
    %1054 = vmatpush.bf16.msra.mxu0 %v362
    %1055 = vmatpush.bf16.msra.mxu0 %v358
    %1056 = vmatpush.bf16.msra.mxu0 %v354
    %1057 = vmatpush.bf16.msra.mxu0 %v350
    %1058 = vmatmul.bf16.gmra.mxu0 %v1010
    %v1059 = vpop.f32.mrf.mxu0
    %v1060 = vadd.f32 0.0, %v1059
    %v1061 = vpop.f32.mrf.mxu0
    %1062 = vdwg.mxu0
    %v1063 = vadd.f32 %v125, %v1021
    %v1064 = vadd.f32 %v154, %v1034
    %v1065 = vadd.f32 %v183, %v1047
    %v1066 = vadd.f32 %v212, %v1060
    %v1067 = vxor.u32 %v1063, 2147483648
    %v1068 = vxor.u32 %v1064, 2147483648
    %v1069 = vxor.u32 %v1065, 2147483648
    %v1070 = vmul.f32 %v1067, 1.442695
    %v1071 = vpow.pop %v1070
    %v1072 = vmul.f32 %v1068, 1.442695
    %v1073 = vpow.pop %v1072
    %v1074 = vmul.f32 %v1069, 1.442695
    %v1075 = vpow.pop %v1074
    %v1076 = vadd.f32 %v1071, 1.0
    %v1077 = vadd.f32 %v1073, 1.0
    %v1078 = vadd.f32 %v1075, 1.0
    %v1079 = vrcp.pop %v1076
    %v1080 = vmul.f32 %v1076, %v1079
    %v1081 = vsub.f32 1.0, %v1080
    %v1082 = vmul.f32 %v1079, %v1081
    %v1083 = vadd.f32 %v1079, %v1082
    %vm1084 = vweird.f32 %v1076
    %vm1085 = vweird.f32 %v1079
    %vm1086 = vmor %vm1084, %vm1085
    %v1087 = vsel %vm1086, %v1079, %v1083
    %v1088 = vand.u32 2147483647, %v1076
    %vm1089 = vcmp.eq.f32.partialorder %v1088, 8.507059e+37
    %v1090 = vand.u32 %v1076, 2147483648
    %v1091 = vor.u32 1.1754944e-38, %v1090
    %v1092 = vsel %vm1089, %v1091, %v1087
    %v1093 = vmul.f32 1.0, %v1092
    %v1094 = vrcp.pop %v1077
    %v1095 = vmul.f32 %v1077, %v1094
    %v1096 = vsub.f32 1.0, %v1095
    %v1097 = vmul.f32 %v1094, %v1096
    %v1098 = vadd.f32 %v1094, %v1097
    %vm1099 = vweird.f32 %v1077
    %vm1100 = vweird.f32 %v1094
    %vm1101 = vmor %vm1099, %vm1100
    %v1102 = vsel %vm1101, %v1094, %v1098
    %v1103 = vand.u32 2147483647, %v1077
    %vm1104 = vcmp.eq.f32.partialorder %v1103, 8.507059e+37
    %v1105 = vand.u32 %v1077, 2147483648
    %v1106 = vor.u32 1.1754944e-38, %v1105
    %v1107 = vsel %vm1104, %v1106, %v1102
    %v1108 = vmul.f32 1.0, %v1107
    %v1109 = vrcp.pop %v1078
    %v1110 = vmul.f32 %v1078, %v1109
    %v1111 = vsub.f32 1.0, %v1110
    %v1112 = vmul.f32 %v1109, %v1111
    %v1113 = vadd.f32 %v1109, %v1112
    %vm1114 = vweird.f32 %v1078
    %vm1115 = vweird.f32 %v1109
    %vm1116 = vmor %vm1114, %vm1115
    %v1117 = vsel %vm1116, %v1109, %v1113
    %v1118 = vand.u32 2147483647, %v1078
    %vm1119 = vcmp.eq.f32.partialorder %v1118, 8.507059e+37
    %v1120 = vand.u32 %v1078, 2147483648
    %v1121 = vor.u32 1.1754944e-38, %v1120
    %v1122 = vsel %vm1119, %v1121, %v1117
    %v1123 = vmul.f32 1.0, %v1122
    %v1124 = vtanh.pop %v1066
    %v1125 = vmul.f32 %v1108, %v1007
    %v1126 = vmul.f32 %v1093, %v1124
    %v1127 = vadd.f32 %v1125, %v1126
    %v1128 = vtanh.pop %v1127
    %v1129 = vmul.f32 %v1123, %v1128
    %v1130 = vpack.c.bf16 %v1129, %v1129
    %1131 = vmatpush.bf16.msra.mxu0 %v375
    %1132 = vmatpush.bf16.msra.mxu0 %v371
    %1133 = vmatpush.bf16.msra.mxu0 %v367
    %1134 = vmatpush.bf16.msra.mxu0 %v363
    %1135 = vmatpush.bf16.msra.mxu0 %v359
    %1136 = vmatpush.bf16.msra.mxu0 %v355
    %1137 = vmatpush.bf16.msra.mxu0 %v351
    %1138 = vmatpush.bf16.msra.mxu0 %v347
    %1139 = vmatmul.bf16.gmra.mxu0 %v1130
    %v1140 = vpop.f32.mrf.mxu0
    %v1141 = vadd.f32 0.0, %v1140
    %v1142 = vpop.f32.mrf.mxu0
    %1143 = vdwg.mxu0
    %1144 = vmatpush.bf16.msra.mxu0 %v376
    %1145 = vmatpush.bf16.msra.mxu0 %v372
    %1146 = vmatpush.bf16.msra.mxu0 %v368
    %1147 = vmatpush.bf16.msra.mxu0 %v364
    %1148 = vmatpush.bf16.msra.mxu0 %v360
    %1149 = vmatpush.bf16.msra.mxu0 %v356
    %1150 = vmatpush.bf16.msra.mxu0 %v352
    %1151 = vmatpush.bf16.msra.mxu0 %v348
    %1152 = vmatmul.bf16.gmra.mxu0 %v1130
    %v1153 = vpop.f32.mrf.mxu0
    %v1154 = vadd.f32 0.0, %v1153
    %v1155 = vpop.f32.mrf.mxu0
    %1156 = vdwg.mxu0
    %1157 = vmatpush.bf16.msra.mxu0 %v377
    %1158 = vmatpush.bf16.msra.mxu0 %v373
    %1159 = vmatpush.bf16.msra.mxu0 %v369
    %1160 = vmatpush.bf16.msra.mxu0 %v365
    %1161 = vmatpush.bf16.msra.mxu0 %v361
    %1162 = vmatpush.bf16.msra.mxu0 %v357
    %1163 = vmatpush.bf16.msra.mxu0 %v353
    %1164 = vmatpush.bf16.msra.mxu0 %v349
    %1165 = vmatmul.bf16.gmra.mxu0 %v1130
    %v1166 = vpop.f32.mrf.mxu0
    %v1167 = vadd.f32 0.0, %v1166
    %v1168 = vpop.f32.mrf.mxu0
    %1169 = vdwg.mxu0
    %1170 = vmatpush.bf16.msra.mxu0 %v378
    %1171 = vmatpush.bf16.msra.mxu0 %v374
    %1172 = vmatpush.bf16.msra.mxu0 %v370
    %1173 = vmatpush.bf16.msra.mxu0 %v366
    %1174 = vmatpush.bf16.msra.mxu0 %v362
    %1175 = vmatpush.bf16.msra.mxu0 %v358
    %1176 = vmatpush.bf16.msra.mxu0 %v354
    %1177 = vmatpush.bf16.msra.mxu0 %v350
    %1178 = vmatmul.bf16.gmra.mxu0 %v1130
    %v1179 = vpop.f32.mrf.mxu0
    %v1180 = vadd.f32 0.0, %v1179
    %v1181 = vpop.f32.mrf.mxu0
    %1182 = vdwg.mxu0
    %v1183 = vadd.f32 %v128, %v1141
    %v1184 = vadd.f32 %v157, %v1154
    %v1185 = vadd.f32 %v186, %v1167
    %v1186 = vadd.f32 %v215, %v1180
    %v1187 = vxor.u32 %v1183, 2147483648
    %v1188 = vxor.u32 %v1184, 2147483648
    %v1189 = vxor.u32 %v1185, 2147483648
    %v1190 = vmul.f32 %v1187, 1.442695
    %v1191 = vpow.pop %v1190
    %v1192 = vmul.f32 %v1188, 1.442695
    %v1193 = vpow.pop %v1192
    %v1194 = vmul.f32 %v1189, 1.442695
    %v1195 = vpow.pop %v1194
    %v1196 = vadd.f32 %v1191, 1.0
    %v1197 = vadd.f32 %v1193, 1.0
    %v1198 = vadd.f32 %v1195, 1.0
    %v1199 = vrcp.pop %v1196
    %v1200 = vmul.f32 %v1196, %v1199
    %v1201 = vsub.f32 1.0, %v1200
    %v1202 = vmul.f32 %v1199, %v1201
    %v1203 = vadd.f32 %v1199, %v1202
    %vm1204 = vweird.f32 %v1196
    %vm1205 = vweird.f32 %v1199
    %vm1206 = vmor %vm1204, %vm1205
    %v1207 = vsel %vm1206, %v1199, %v1203
    %v1208 = vand.u32 2147483647, %v1196
    %vm1209 = vcmp.eq.f32.partialorder %v1208, 8.507059e+37
    %v1210 = vand.u32 %v1196, 2147483648
    %v1211 = vor.u32 1.1754944e-38, %v1210
    %v1212 = vsel %vm1209, %v1211, %v1207
    %v1213 = vmul.f32 1.0, %v1212
    %v1214 = vrcp.pop %v1197
    %v1215 = vmul.f32 %v1197, %v1214
    %v1216 = vsub.f32 1.0, %v1215
    %v1217 = vmul.f32 %v1214, %v1216
    %v1218 = vadd.f32 %v1214, %v1217
    %vm1219 = vweird.f32 %v1197
    %vm1220 = vweird.f32 %v1214
    %vm1221 = vmor %vm1219, %vm1220
    %v1222 = vsel %vm1221, %v1214, %v1218
    %v1223 = vand.u32 2147483647, %v1197
    %vm1224 = vcmp.eq.f32.partialorder %v1223, 8.507059e+37
    %v1225 = vand.u32 %v1197, 2147483648
    %v1226 = vor.u32 1.1754944e-38, %v1225
    %v1227 = vsel %vm1224, %v1226, %v1222
    %v1228 = vmul.f32 1.0, %v1227
    %v1229 = vrcp.pop %v1198
    %v1230 = vmul.f32 %v1198, %v1229
    %v1231 = vsub.f32 1.0, %v1230
    %v1232 = vmul.f32 %v1229, %v1231
    %v1233 = vadd.f32 %v1229, %v1232
    %vm1234 = vweird.f32 %v1198
    %vm1235 = vweird.f32 %v1229
    %vm1236 = vmor %vm1234, %vm1235
    %v1237 = vsel %vm1236, %v1229, %v1233
    %v1238 = vand.u32 2147483647, %v1198
    %vm1239 = vcmp.eq.f32.partialorder %v1238, 8.507059e+37
    %v1240 = vand.u32 %v1198, 2147483648
    %v1241 = vor.u32 1.1754944e-38, %v1240
    %v1242 = vsel %vm1239, %v1241, %v1237
    %v1243 = vmul.f32 1.0, %v1242
    %v1244 = vtanh.pop %v1186
    %v1245 = vmul.f32 %v1228, %v1127
    %v1246 = vmul.f32 %v1213, %v1244
    %v1247 = vadd.f32 %v1245, %v1246
    %v1248 = vtanh.pop %v1247
    %v1249 = vmul.f32 %v1243, %v1248
    %v1250 = vpack.c.bf16 %v1249, %v1249
    %1251 = vmatpush.bf16.msra.mxu0 %v375
    %1252 = vmatpush.bf16.msra.mxu0 %v371
    %1253 = vmatpush.bf16.msra.mxu0 %v367
    %1254 = vmatpush.bf16.msra.mxu0 %v363
    %1255 = vmatpush.bf16.msra.mxu0 %v359
    %1256 = vmatpush.bf16.msra.mxu0 %v355
    %1257 = vmatpush.bf16.msra.mxu0 %v351
    %1258 = vmatpush.bf16.msra.mxu0 %v347
    %1259 = vmatmul.bf16.gmra.mxu0 %v1250
    %v1260 = vpop.f32.mrf.mxu0
    %v1261 = vadd.f32 0.0, %v1260
    %v1262 = vpop.f32.mrf.mxu0
    %1263 = vdwg.mxu0
    %1264 = vmatpush.bf16.msra.mxu0 %v376
    %1265 = vmatpush.bf16.msra.mxu0 %v372
    %1266 = vmatpush.bf16.msra.mxu0 %v368
    %1267 = vmatpush.bf16.msra.mxu0 %v364
    %1268 = vmatpush.bf16.msra.mxu0 %v360
    %1269 = vmatpush.bf16.msra.mxu0 %v356
    %1270 = vmatpush.bf16.msra.mxu0 %v352
    %1271 = vmatpush.bf16.msra.mxu0 %v348
    %1272 = vmatmul.bf16.gmra.mxu0 %v1250
    %v1273 = vpop.f32.mrf.mxu0
    %v1274 = vadd.f32 0.0, %v1273
    %v1275 = vpop.f32.mrf.mxu0
    %1276 = vdwg.mxu0
    %1277 = vmatpush.bf16.msra.mxu0 %v377
    %1278 = vmatpush.bf16.msra.mxu0 %v373
    %1279 = vmatpush.bf16.msra.mxu0 %v369
    %1280 = vmatpush.bf16.msra.mxu0 %v365
    %1281 = vmatpush.bf16.msra.mxu0 %v361
    %1282 = vmatpush.bf16.msra.mxu0 %v357
    %1283 = vmatpush.bf16.msra.mxu0 %v353
    %1284 = vmatpush.bf16.msra.mxu0 %v349
    %1285 = vmatmul.bf16.gmra.mxu0 %v1250
    %v1286 = vpop.f32.mrf.mxu0
    %v1287 = vadd.f32 0.0, %v1286
    %v1288 = vpop.f32.mrf.mxu0
    %1289 = vdwg.mxu0
    %1290 = vmatpush.bf16.msra.mxu0 %v378
    %1291 = vmatpush.bf16.msra.mxu0 %v374
    %1292 = vmatpush.bf16.msra.mxu0 %v370
    %1293 = vmatpush.bf16.msra.mxu0 %v366
    %1294 = vmatpush.bf16.msra.mxu0 %v362
    %1295 = vmatpush.bf16.msra.mxu0 %v358
    %1296 = vmatpush.bf16.msra.mxu0 %v354
    %1297 = vmatpush.bf16.msra.mxu0 %v350
    %1298 = vmatmul.bf16.gmra.mxu0 %v1250
    %v1299 = vpop.f32.mrf.mxu0
    %v1300 = vadd.f32 0.0, %v1299
    %v1301 = vpop.f32.mrf.mxu0
    %1302 = vdwg.mxu0
    %v1303 = vadd.f32 %v130, %v1261
    %v1304 = vadd.f32 %v159, %v1274
    %v1305 = vadd.f32 %v188, %v1287
    %v1306 = vadd.f32 %v217, %v1300
    %v1307 = vxor.u32 %v1303, 2147483648
    %v1308 = vxor.u32 %v1304, 2147483648
    %v1309 = vxor.u32 %v1305, 2147483648
    %v1310 = vmul.f32 %v1307, 1.442695
    %v1311 = vpow.pop %v1310
    %v1312 = vmul.f32 %v1308, 1.442695
    %v1313 = vpow.pop %v1312
    %v1314 = vmul.f32 %v1309, 1.442695
    %v1315 = vpow.pop %v1314
    %v1316 = vadd.f32 %v1311, 1.0
    %v1317 = vadd.f32 %v1313, 1.0
    %v1318 = vadd.f32 %v1315, 1.0
    %v1319 = vrcp.pop %v1316
    %v1320 = vmul.f32 %v1316, %v1319
    %v1321 = vsub.f32 1.0, %v1320
    %v1322 = vmul.f32 %v1319, %v1321
    %v1323 = vadd.f32 %v1319, %v1322
    %vm1324 = vweird.f32 %v1316
    %vm1325 = vweird.f32 %v1319
    %vm1326 = vmor %vm1324, %vm1325
    %v1327 = vsel %vm1326, %v1319, %v1323
    %v1328 = vand.u32 2147483647, %v1316
    %vm1329 = vcmp.eq.f32.partialorder %v1328, 8.507059e+37
    %v1330 = vand.u32 %v1316, 2147483648
    %v1331 = vor.u32 1.1754944e-38, %v1330
    %v1332 = vsel %vm1329, %v1331, %v1327
    %v1333 = vmul.f32 1.0, %v1332
    %v1334 = vrcp.pop %v1317
    %v1335 = vmul.f32 %v1317, %v1334
    %v1336 = vsub.f32 1.0, %v1335
    %v1337 = vmul.f32 %v1334, %v1336
    %v1338 = vadd.f32 %v1334, %v1337
    %vm1339 = vweird.f32 %v1317
    %vm1340 = vweird.f32 %v1334
    %vm1341 = vmor %vm1339, %vm1340
    %v1342 = vsel %vm1341, %v1334, %v1338
    %v1343 = vand.u32 2147483647, %v1317
    %vm1344 = vcmp.eq.f32.partialorder %v1343, 8.507059e+37
    %v1345 = vand.u32 %v1317, 2147483648
    %v1346 = vor.u32 1.1754944e-38, %v1345
    %v1347 = vsel %vm1344, %v1346, %v1342
    %v1348 = vmul.f32 1.0, %v1347
    %v1349 = vrcp.pop %v1318
    %v1350 = vmul.f32 %v1318, %v1349
    %v1351 = vsub.f32 1.0, %v1350
    %v1352 = vmul.f32 %v1349, %v1351
    %v1353 = vadd.f32 %v1349, %v1352
    %vm1354 = vweird.f32 %v1318
    %vm1355 = vweird.f32 %v1349
    %vm1356 = vmor %vm1354, %vm1355
    %v1357 = vsel %vm1356, %v1349, %v1353
    %v1358 = vand.u32 2147483647, %v1318
    %vm1359 = vcmp.eq.f32.partialorder %v1358, 8.507059e+37
    %v1360 = vand.u32 %v1318, 2147483648
    %v1361 = vor.u32 1.1754944e-38, %v1360
    %v1362 = vsel %vm1359, %v1361, %v1357
    %v1363 = vmul.f32 1.0, %v1362
    %v1364 = vtanh.pop %v1306
    %v1365 = vmul.f32 %v1348, %v1247
    %v1366 = vmul.f32 %v1333, %v1364
    %v1367 = vadd.f32 %v1365, %v1366
    %v1368 = vtanh.pop %v1367
    %v1369 = vmul.f32 %v1363, %v1368
    %v1370 = vld [vmem:[%s3] sm:$0x3]
    %v1371 = vperm.slane %v1370, 0
    %v1372 = vmul.f32 %v1369, %v1371
    %1373 = vadd.xlane.f32.xlu0 %v1372
    %v1374 = vpop.xlane.xlu0 %1373
    %v1375 = vperm.slane %v1370, 1
    %v1376 = vadd.f32 %v1374, %v1375
    %vm1377 = vcmask 7168
    %1378 = vst.msk [vmem:[%s4] sm:$0xff] %vm1377, %v1376
    // Predicated region
    $region22: #{tpu_custom_call.1} parent=1 // pred_check
      _
    $region23: #{tpu_custom_call.1} parent=1 // pred_check_branch
      %1380 = sbr.rel (0) target = $region25
    $region24: #{tpu_custom_call.1} parent=1 // pred_region
      _
    $region25: #{tpu_custom_call.1} parent=1 // pred_fallthru
      _
    // Predicated region
    $region26: #{tpu_custom_call.1} parent=1 // pred_check
      _
    $region27: #{tpu_custom_call.1} parent=1 // pred_check_branch
      %1382 = sbr.rel (0) target = $region29
    $region28: #{tpu_custom_call.1} parent=1 // pred_region
      _
    $region29: #{tpu_custom_call.1} parent=1 // pred_fallthru
      _
    %1383 = vsyncpa [#allocation3], 1

</llo_original>
